<compile_context>
chip_gen: v7x
topology: tpu7x:2x2x1
jax: 0.10.0
libtpu: 0.0.40
codegen_flags: <defaults>
</compile_context>

<pallas_src>
import functools

import jax
import jax.numpy as jnp
from jax import lax
from jax.experimental import pallas as pl
from jax.experimental.pallas import tpu as pltpu

_VMEM_LIMIT_BYTES = 48 * 1024 * 1024   # below physical VMEM on v5e/v6e (128 MiB) and v7x (64 MiB)
_VMEM_BUDGET_BYTES = 36 * 1024 * 1024  # working-set budget used to clamp block_q


def _softmax_av(s, v, out_ref, attn_ref):
    """Row softmax of f32 scores `s` over the key axis, then attn @ v."""
    m = jnp.max(s, axis=-1, keepdims=True)
    e = jnp.exp(s - m)
    denom = jnp.sum(e, axis=-1, keepdims=True)
    p = e * pl.reciprocal(denom, approx=True)       # EUP reciprocal + VPU multiply
    attn_ref[0] = p.astype(attn_ref.dtype)
    # TODO(synk): nn.Dropout(attn_dropout) training-mode masking not implemented
    #             (eval-mode identity).
    out_ref[0] = jnp.dot(p.astype(v.dtype), v,
                         preferred_element_type=jnp.float32).astype(out_ref.dtype)


def _sdpa_kernel(q_ref, k_ref, v_ref, out_ref, attn_ref, *, inv_temperature):
    q = q_ref[0] * inv_temperature                  # scale folded into q, native dtype
    # q @ k^T: contract last dims (no explicit transpose), f32 accumulate on MXU.
    s = lax.dot_general(q, k_ref[0], (((1,), (1,)), ((), ())),
                        preferred_element_type=jnp.float32)
    _softmax_av(s, v_ref[0], out_ref, attn_ref)


def _sdpa_masked_kernel(q_ref, k_ref, v_ref, bias_ref, out_ref, attn_ref, *,
                        inv_temperature):
    q = q_ref[0] * inv_temperature
    s = lax.dot_general(q, k_ref[0], (((1,), (1,)), ((), ())),
                        preferred_element_type=jnp.float32)
    s = s + bias_ref[0]                             # additive mask: 0 / -1e30 (bf16)
    _softmax_av(s, v_ref[0], out_ref, attn_ref)


def _choose_block_q(block_q, lq, lk, dk, dv, itemsize, masked):
    """Largest multiple of 128 <= block_q whose working set fits the VMEM budget."""
    tq = max(128, 128 * pl.cdiv(min(block_q, max(lq, 1)), 128))
    while tq > 128:
        per_step = 2 * itemsize * (tq * dk + lk * dk + lk * dv
                                   + tq * dv + tq * lk)      # double-buffered tiles
        per_step += 4 * 4 * tq * lk                          # f32 s/e/p intermediates
        if masked:
            per_step += 2 * 2 * tq * lk                      # bf16 bias tile
        if per_step <= _VMEM_BUDGET_BYTES:
            break
        tq -= 128
    return tq


def scaled_dot_product_attention(q, k, v, temperature, mask=None, *, block_q=256):
    """q: (B, Lq, Dk), k: (B, Lk, Dk), v: (B, Lk, Dv).

    mask: optional bool/int array of shape (Lq, Lk), (1, Lq, Lk) or (B, Lq, Lk);
    nonzero entries are masked out (PyTorch masked_fill semantics).
    Returns (output (B, Lq, Dv), attn (B, Lq, Lk)), both in q.dtype.
    """
    B, Lq, Dk = q.shape
    Bk, Lk, Dk2 = k.shape
    Bv, Lkv, Dv = v.shape
    assert (B, Dk) == (Bk, Dk2) and (B, Lk) == (Bv, Lkv)

    tq = _choose_block_q(block_q, Lq, Lk, Dk, Dv, q.dtype.itemsize,
                         masked=mask is not None)
    n_q = pl.cdiv(Lq, tq)
    Lq_pad = n_q * tq
    if Lq_pad != Lq:
        q = jnp.pad(q, ((0, 0), (0, Lq_pad - Lq), (0, 0)))

    grid = (B, n_q)
    q_spec = pl.BlockSpec((1, tq, Dk), lambda b, i: (b, i, 0))
    k_spec = pl.BlockSpec((1, Lk, Dk), lambda b, i: (b, 0, 0))   # grid-invariant in i
    v_spec = pl.BlockSpec((1, Lk, Dv), lambda b, i: (b, 0, 0))
    out_specs = (pl.BlockSpec((1, tq, Dv), lambda b, i: (b, i, 0)),
                 pl.BlockSpec((1, tq, Lk), lambda b, i: (b, i, 0)))
    out_shape = (jax.ShapeDtypeStruct((B, Lq_pad, Dv), q.dtype),
                 jax.ShapeDtypeStruct((B, Lq_pad, Lk), q.dtype))
    cparams = pltpu.CompilerParams(
        dimension_semantics=("parallel", "parallel"),
        vmem_limit_bytes=_VMEM_LIMIT_BYTES)
    inv_temp = 1.0 / float(temperature)

    if mask is None:
        kernel = functools.partial(_sdpa_kernel, inv_temperature=inv_temp)
        out, attn = pl.pallas_call(
            kernel, out_shape=out_shape, grid=grid,
            in_specs=[q_spec, k_spec, v_spec], out_specs=out_specs,
            compiler_params=cparams,
        )(q, k, v)
    else:
        if mask.ndim == 2:
            mask = mask[None]
        Bm = mask.shape[0]
        assert mask.shape[1:] == (Lq, Lk) and Bm in (1, B)
        # bf16 additive bias at the mask's native batch extent (no B-broadcast in HBM).
        bias = jnp.where(mask != 0, -1e30, 0.0).astype(jnp.bfloat16)
        if Lq_pad != Lq:
            bias = jnp.pad(bias, ((0, 0), (0, Lq_pad - Lq), (0, 0)))
        bias_map = (lambda b, i: (0, i, 0)) if Bm == 1 else (lambda b, i: (b, i, 0))
        bias_spec = pl.BlockSpec((1, tq, Lk), bias_map)
        kernel = functools.partial(_sdpa_masked_kernel, inv_temperature=inv_temp)
        out, attn = pl.pallas_call(
            kernel, out_shape=out_shape, grid=grid,
            in_specs=[q_spec, k_spec, v_spec, bias_spec], out_specs=out_specs,
            compiler_params=cparams,
        )(q, k, v, bias)

    if Lq_pad != Lq:
        out, attn = out[:, :Lq], attn[:, :Lq]
    return out, attn


if __name__ == "__main__":
    keys = jax.random.split(jax.random.PRNGKey(0), 6)
    hp = jax.lax.Precision.HIGHEST

    # --- bf16 test: bf16 MXU path, multiple q blocks, padded tail (384 % 256 != 0) ---
    B, Lq, Lk, Dk, Dv = 2, 384, 128, 64, 64
    temperature = Dk ** 0.5
    q = jax.random.normal(keys[0], (B, Lq, Dk), jnp.float32).astype(jnp.bfloat16)
    k = jax.random.normal(keys[1], (B, Lk, Dk), jnp.float32).astype(jnp.bfloat16)
    v = jax.random.normal(keys[2], (B, Lk, Dv), jnp.float32).astype(jnp.bfloat16)

    out, attn = scaled_dot_product_attention(q, k, v, temperature)
    out, attn = jax.block_until_ready((out, attn))
    assert out.shape == (B, Lq, Dv) and attn.shape == (B, Lq, Lk)
    assert out.dtype == q.dtype and attn.dtype == q.dtype

    qf, kf, vf = (x.astype(jnp.float32) for x in (q, k, v))
    s_ref = jnp.einsum("bqd,bkd->bqk", qf, kf, precision=hp) / temperature
    a_ref = jax.nn.softmax(s_ref, axis=-1)
    o_ref = jnp.einsum("bqk,bkd->bqd", a_ref, vf, precision=hp)
    assert jnp.allclose(attn.astype(jnp.float32), a_ref, atol=3e-2, rtol=3e-2), "attn mismatch"
    assert jnp.allclose(out.astype(jnp.float32), o_ref, atol=3e-2, rtol=3e-2), "output mismatch"

    # --- masked bf16 test (causal-style boolean mask, True = masked out) ---
    mask = jnp.triu(jnp.ones((Lq, Lk), jnp.bool_), 1)[None]       # (1, Lq, Lk)
    out_m, attn_m = scaled_dot_product_attention(q, k, v, temperature, mask=mask)
    out_m, attn_m = jax.block_until_ready((out_m, attn_m))
    s_m = jnp.where(mask, -jnp.inf, s_ref)
    a_m = jax.nn.softmax(s_m, axis=-1)
    o_m = jnp.einsum("bqk,bkd->bqd", a_m, vf, precision=hp)
    assert jnp.allclose(attn_m.astype(jnp.float32), a_m, atol=3e-2, rtol=3e-2), "masked attn mismatch"
    assert jnp.allclose(out_m.astype(jnp.float32), o_m, atol=3e-2, rtol=3e-2), "masked output mismatch"

    # --- f32 test with Lq not a multiple of 128 (padding path, small dims) ---
    B2, Lq2, Lk2, Dk2, Dv2 = 1, 72, 64, 32, 32
    q2 = jax.random.normal(keys[3], (B2, Lq2, Dk2), jnp.float32)
    k2 = jax.random.normal(keys[4], (B2, Lk2, Dk2), jnp.float32)
    v2 = jax.random.normal(keys[5], (B2, Lk2, Dv2), jnp.float32)
    out2, attn2 = scaled_dot_product_attention(q2, k2, v2, Dk2 ** 0.5)
    out2, attn2 = jax.block_until_ready((out2, attn2))
    assert out2.shape == (B2, Lq2, Dv2) and attn2.shape == (B2, Lq2, Lk2)
    s2 = jnp.einsum("bqd,bkd->bqk", q2, k2, precision=hp) / (Dk2 ** 0.5)
    a2 = jax.nn.softmax(s2, axis=-1)
    o2 = jnp.einsum("bqk,bkd->bqd", a2, v2, precision=hp)
    assert jnp.allclose(attn2, a2, atol=1e-2, rtol=1e-2), "f32 attn mismatch"
    assert jnp.allclose(out2, o2, atol=1e-2, rtol=1e-2), "f32 output mismatch"

    print("KERNEL_OK")
</pallas_src>

<mosaic_0001>
module attributes {stable_mosaic.version = 11 : i64} {
  func.func @_sdpa_kernel(%arg0: i32, %arg1: i32, %arg2: memref<1x256x64xbf16, #tpu.memory_space<vmem>>, %arg3: memref<1x128x64xbf16, #tpu.memory_space<vmem>>, %arg4: memref<1x128x64xbf16, #tpu.memory_space<vmem>>, %arg5: memref<1x256x64xbf16, #tpu.memory_space<vmem>>, %arg6: memref<1x256x128xbf16, #tpu.memory_space<vmem>>) attributes {dimension_semantics = [#tpu.dimension_semantics<parallel>, #tpu.dimension_semantics<parallel>], iteration_bounds = array<i64: 2, 2>, scalar_prefetch = 0 : i64, scratch_operands = 0 : i64, tpu.core_type = #tpu.core_type<tc>, window_params = [{transform_indices = @transform_0, window_bounds = array<i64: 1, 256, 64>}, {transform_indices = @transform_1, window_bounds = array<i64: 1, 128, 64>}, {transform_indices = @transform_2, window_bounds = array<i64: 1, 128, 64>}, {transform_indices = @transform_3, window_bounds = array<i64: 1, 256, 64>}, {transform_indices = @transform_4, window_bounds = array<i64: 1, 256, 128>}]} {
    %c0 = arith.constant 0 : index
    %c0_0 = arith.constant 0 : index
    %c0_1 = arith.constant 0 : index
    %0 = vector.load %arg2[%c0, %c0_0, %c0_1] : memref<1x256x64xbf16, #tpu.memory_space<vmem>>, vector<1x256x64xbf16>
    %1 = vector.shape_cast %0 : vector<1x256x64xbf16> to vector<256x64xbf16>
    %cst = arith.constant 1.250000e-01 : bf16
    %2 = vector.broadcast %cst : bf16 to vector<256x64xbf16>
    %3 = arith.mulf %1, %2 : vector<256x64xbf16>
    %c0_2 = arith.constant 0 : index
    %c0_3 = arith.constant 0 : index
    %c0_4 = arith.constant 0 : index
    %4 = vector.load %arg3[%c0_2, %c0_3, %c0_4] : memref<1x128x64xbf16, #tpu.memory_space<vmem>>, vector<1x128x64xbf16>
    %5 = vector.shape_cast %4 : vector<1x128x64xbf16> to vector<128x64xbf16>
    %cst_5 = arith.constant dense<0.000000e+00> : vector<256x128xf32>
    %6 = tpu.matmul %3, %5, %cst_5 {dimension_numbers = #tpu.dot_dimension_numbers<[1], [1], [0], [0], [0, 0, 1, 0], [], []>} : vector<256x64xbf16>, vector<128x64xbf16>, vector<256x128xf32> -> vector<256x128xf32>
    %c0_6 = arith.constant 0 : index
    %c0_7 = arith.constant 0 : index
    %c0_8 = arith.constant 0 : index
    %7 = vector.load %arg4[%c0_6, %c0_7, %c0_8] : memref<1x128x64xbf16, #tpu.memory_space<vmem>>, vector<1x128x64xbf16>
    %8 = vector.shape_cast %7 : vector<1x128x64xbf16> to vector<128x64xbf16>
    %cst_9 = arith.constant dense<0xFF800000> : vector<256xf32>
    %9 = vector.multi_reduction <maximumf>, %6, %cst_9 [1] : vector<256x128xf32> to vector<256xf32>
    %10 = vector.shape_cast %9 : vector<256xf32> to vector<256x1xf32>
    %11 = vector.broadcast %10 : vector<256x1xf32> to vector<256x128xf32>
    %12 = arith.subf %6, %11 : vector<256x128xf32>
    %13 = math.exp %12 : vector<256x128xf32>
    %cst_10 = arith.constant dense<0.000000e+00> : vector<256xf32>
    %14 = vector.multi_reduction <add>, %13, %cst_10 [1] : vector<256x128xf32> to vector<256xf32>
    %15 = vector.shape_cast %14 : vector<256xf32> to vector<256x1xf32>
    %16 = tpu.reciprocal %15 {approx = true} : vector<256x1xf32> -> vector<256x1xf32>
    %17 = vector.broadcast %16 : vector<256x1xf32> to vector<256x128xf32>
    %18 = arith.mulf %13, %17 : vector<256x128xf32>
    %19 = arith.truncf %18 : vector<256x128xf32> to vector<256x128xbf16>
    %c0_11 = arith.constant 0 : index
    %c0_12 = arith.constant 0 : index
    %c0_13 = arith.constant 0 : index
    %20 = vector.load %arg6[%c0_11, %c0_12, %c0_13] : memref<1x256x128xbf16, #tpu.memory_space<vmem>>, vector<1x256x128xbf16>
    %21 = vector.shape_cast %20 : vector<1x256x128xbf16> to vector<256x128xbf16>
    %22 = vector.shape_cast %19 : vector<256x128xbf16> to vector<1x256x128xbf16>
    tpu.vector_store %arg6[%c0_11, %c0_12, %c0_13], %22 {strides = array<i32>} : memref<1x256x128xbf16, #tpu.memory_space<vmem>>, vector<1x256x128xbf16>,
    %23 = arith.truncf %18 : vector<256x128xf32> to vector<256x128xbf16>
    %cst_14 = arith.constant dense<0.000000e+00> : vector<256x64xf32>
    %24 = tpu.matmul %23, %8, %cst_14 {dimension_numbers = #tpu.dot_dimension_numbers<[1], [0], [0], [1], [0, 0, 1, 1], [], []>} : vector<256x128xbf16>, vector<128x64xbf16>, vector<256x64xf32> -> vector<256x64xf32>
    %25 = arith.truncf %24 : vector<256x64xf32> to vector<256x64xbf16>
    %c0_15 = arith.constant 0 : index
    %c0_16 = arith.constant 0 : index
    %c0_17 = arith.constant 0 : index
    %26 = vector.load %arg5[%c0_15, %c0_16, %c0_17] : memref<1x256x64xbf16, #tpu.memory_space<vmem>>, vector<1x256x64xbf16>
    %27 = vector.shape_cast %26 : vector<1x256x64xbf16> to vector<256x64xbf16>
    %28 = vector.shape_cast %25 : vector<256x64xbf16> to vector<1x256x64xbf16>
    tpu.vector_store %arg5[%c0_15, %c0_16, %c0_17], %28 {strides = array<i32>} : memref<1x256x64xbf16, #tpu.memory_space<vmem>>, vector<1x256x64xbf16>,
    return
  }
  func.func @transform_0(%arg0: i32, %arg1: i32) -> (i32, i32, i32) {
    %c0_i32 = arith.constant 0 : i32
    %c0_i32_0 = arith.constant 0 : i32
    return %arg0, %arg1, %c0_i32 : i32, i32, i32
  }
  func.func @transform_1(%arg0: i32, %arg1: i32) -> (i32, i32, i32) {
    %c0_i32 = arith.constant 0 : i32
    %c0_i32_0 = arith.constant 0 : i32
    %c0_i32_1 = arith.constant 0 : i32
    return %arg0, %c0_i32, %c0_i32_0 : i32, i32, i32
  }
  func.func @transform_2(%arg0: i32, %arg1: i32) -> (i32, i32, i32) {
    %c0_i32 = arith.constant 0 : i32
    %c0_i32_0 = arith.constant 0 : i32
    %c0_i32_1 = arith.constant 0 : i32
    return %arg0, %c0_i32, %c0_i32_0 : i32, i32, i32
  }
  func.func @transform_3(%arg0: i32, %arg1: i32) -> (i32, i32, i32) {
    %c0_i32 = arith.constant 0 : i32
    %c0_i32_0 = arith.constant 0 : i32
    return %arg0, %arg1, %c0_i32 : i32, i32, i32
  }
  func.func @transform_4(%arg0: i32, %arg1: i32) -> (i32, i32, i32) {
    %c0_i32 = arith.constant 0 : i32
    %c0_i32_0 = arith.constant 0 : i32
    return %arg0, %arg1, %c0_i32 : i32, i32, i32
  }
}

</mosaic_0001>

<llo_original>
// kernel: tpu_custom_call.1
$region0: #{tpu_custom_call.1}
  #allocation0 [shape = 'u32[]', space=smem, size = 0x4, offset = 0x4, fixed_abs, tag = 'smem constant byte address 0x4 - core index']
  #allocation1 [shape = 'u32[144,128]{1,0:T(1,128)}', space=vmem, size = 0x12000, scoped, tag = 'internal scratch']
  %s0 = inlined_call_operand.vmem [shape: bf16[2,512,64], index: 0, kind: input, shape index: {}]
  %s1 = inlined_call_operand.vmem [shape: bf16[2,128,64], index: 1, kind: input, shape index: {}]
  %s2 = inlined_call_operand.vmem [shape: bf16[2,128,64], index: 2, kind: input, shape index: {}]
  %s3 = inlined_call_operand.vmem [shape: bf16[2,512,64], index: 3, kind: output, shape index: {0}]
  %s4 = inlined_call_operand.hbm [shape: bf16[2,512,128], index: 4, kind: output, shape index: {1}]
  %5 = xla_tuple %s3, %s4
  %s6 = sld [smem:[#allocation0]]
  $region53: #{tpu_custom_call.1} parent=0
    _
  %s8 = ssub.s32 1, %s6
  %s9 = scalar_select 0, %s8, %s6
  $region1: #{tpu_custom_call.1} parent=0
    #allocation2 [shape = 'u8[131072]{0}', space=vmem, size = 0x20000, scoped, tag = 'output window, operand 1']
    #allocation3 [shape = 's32[2]{0}', space=sflag, size = 0x8, scoped, tag = 'scoped memory for tpu_custom_call.1']
    %10 = vsyncpa [#allocation3], 0
    %s11 = scalar_lea.sflag [#allocation3], 1
    %12 = vsyncpa %s11, 0
    loop: start=0, step=1, limit=6
    $region2: #{tpu_custom_call.1} parent=1 // loop_pre_header
      _
    $region3: #{tpu_custom_call.1} parent=1 // loop_header
      %s14 = sphi 0, %s18
      %p15 = scmp.ge.s32.totalorder %s14, 6
      %s21 = sphi 0, %s33
      %s22 = sphi 0, %s29
      %s23 = sphi 0, %s21
      %s24 = sphi 0, %s22
      %s25 = sphi 0, %s23
      %s26 = sphi 0, %s24
      %s38 = sphi 0, %s40
      %s41 = sphi 0, %s38
      %s42 = sphi 0, %s41
      %s58 = sphi 0, %s42
      %s64 = sphi 0, %s66
      %s67 = sphi 0, %s64
      %s68 = sphi 0, %s67
      %s84 = sphi 0, %s68
      %s90 = sphi 0, %s92
      %s93 = sphi 0, %s90
      %s94 = sphi 0, %s93
      %s110 = sphi 0, %s94
      %s118 = sphi 0, %s120
      %s121 = sphi 0, %s118
      %s122 = sphi 0, %s121
      %s138 = sphi 0, %s122
      %s146 = sphi 0, %s148
      %s149 = sphi 0, %s146
      %s150 = sphi 0, %s149
      %s166 = sphi 0, %s150
    $region4: #{tpu_custom_call.1} parent=1 // loop_header_branch
      %17 = sbr.rel (%p15) target = $region8
    $region5: #{tpu_custom_call.1} parent=1 // loop_body
      %s19 = ssub.s32 %s14, 1
      %s20 = ssub.s32 %s14, 2
      %s27 = sadd.s32 1, %s22
      %p28 = scmp.ge.s32.totalorder %s27, 2
      %s29 = scalar_select %p28, 0, %s27
      %s30 = sadd.s32 1, %s21
      %s31 = scalar_select %p28, %s30, %s21
      %p32 = scmp.ge.s32.totalorder %s31, 2
      %s33 = scalar_select %p32, 0, %s31
      %s34 = ssub.s32 %s21, %s33
      %s35 = ssub.s32 %s22, %s29
      %s36 = sor.u32 %s34, %s35
      %p37 = scmp.eq.s32.totalorder %s36, 0
      %s39 = sadd.s32 %s38, 1
      %s40 = scalar_select %p37, %s38, %s39
      %p43 = pneg %p37
      %p44 = scmp.eq.s32.totalorder %s14, 3
      %p45 = por %p43, %p44
      %p46 = scmp.ne.s32.totalorder %s38, %s41
      %p47 = scmp.eq.s32.totalorder %s14, 0
      %p48 = por %p46, %p47
      %p49 = scmp.ne.s32.totalorder %s38, %s41
      %p50 = scmp.eq.s32.totalorder %s19, 3
      %p51 = por %p49, %p50
      %p52 = scmp.ne.s32.totalorder %s41, %s42
      %p53 = scmp.eq.s32.totalorder %s19, 0
      %p54 = por %p52, %p53
      %p55 = scmp.ne.s32.totalorder %s41, %s42
      %p56 = scmp.eq.s32.totalorder %s20, 3
      %p57 = por %p55, %p56
      %p59 = scmp.ne.s32.totalorder %s42, %s58
      %p60 = scmp.eq.s32.totalorder %s20, 0
      %p61 = por %p59, %p60
      %s62 = ssub.s32 %s21, %s33
      %p63 = scmp.eq.s32.totalorder %s62, 0
      %s65 = sadd.s32 %s64, 1
      %s66 = scalar_select %p63, %s64, %s65
      %p69 = pneg %p63
      %p70 = scmp.eq.s32.totalorder %s14, 3
      %p71 = por %p69, %p70
      %p72 = scmp.ne.s32.totalorder %s64, %s67
      %p73 = scmp.eq.s32.totalorder %s14, 0
      %p74 = por %p72, %p73
      %p75 = scmp.ne.s32.totalorder %s64, %s67
      %p76 = scmp.eq.s32.totalorder %s19, 3
      %p77 = por %p75, %p76
      %p78 = scmp.ne.s32.totalorder %s67, %s68
      %p79 = scmp.eq.s32.totalorder %s19, 0
      %p80 = por %p78, %p79
      %p81 = scmp.ne.s32.totalorder %s67, %s68
      %p82 = scmp.eq.s32.totalorder %s20, 3
      %p83 = por %p81, %p82
      %p85 = scmp.ne.s32.totalorder %s68, %s84
      %p86 = scmp.eq.s32.totalorder %s20, 0
      %p87 = por %p85, %p86
      %s88 = ssub.s32 %s21, %s33
      %p89 = scmp.eq.s32.totalorder %s88, 0
      %s91 = sadd.s32 %s90, 1
      %s92 = scalar_select %p89, %s90, %s91
      %p95 = pneg %p89
      %p96 = scmp.eq.s32.totalorder %s14, 3
      %p97 = por %p95, %p96
      %p98 = scmp.ne.s32.totalorder %s90, %s93
      %p99 = scmp.eq.s32.totalorder %s14, 0
      %p100 = por %p98, %p99
      %p101 = scmp.ne.s32.totalorder %s90, %s93
      %p102 = scmp.eq.s32.totalorder %s19, 3
      %p103 = por %p101, %p102
      %p104 = scmp.ne.s32.totalorder %s93, %s94
      %p105 = scmp.eq.s32.totalorder %s19, 0
      %p106 = por %p104, %p105
      %p107 = scmp.ne.s32.totalorder %s93, %s94
      %p108 = scmp.eq.s32.totalorder %s20, 3
      %p109 = por %p107, %p108
      %p111 = scmp.ne.s32.totalorder %s94, %s110
      %p112 = scmp.eq.s32.totalorder %s20, 0
      %p113 = por %p111, %p112
      %s114 = ssub.s32 %s21, %s33
      %s115 = ssub.s32 %s22, %s29
      %s116 = sor.u32 %s114, %s115
      %p117 = scmp.eq.s32.totalorder %s116, 0
      %s119 = sadd.s32 %s118, 1
      %s120 = scalar_select %p117, %s118, %s119
      %p123 = pneg %p117
      %p124 = scmp.eq.s32.totalorder %s14, 3
      %p125 = por %p123, %p124
      %p126 = scmp.ne.s32.totalorder %s118, %s121
      %p127 = scmp.eq.s32.totalorder %s14, 0
      %p128 = por %p126, %p127
      %p129 = scmp.ne.s32.totalorder %s118, %s121
      %p130 = scmp.eq.s32.totalorder %s19, 3
      %p131 = por %p129, %p130
      %p132 = scmp.ne.s32.totalorder %s121, %s122
      %p133 = scmp.eq.s32.totalorder %s19, 0
      %p134 = por %p132, %p133
      %p135 = scmp.ne.s32.totalorder %s121, %s122
      %p136 = scmp.eq.s32.totalorder %s20, 3
      %p137 = por %p135, %p136
      %p139 = scmp.ne.s32.totalorder %s122, %s138
      %p140 = scmp.eq.s32.totalorder %s20, 0
      %p141 = por %p139, %p140
      %s142 = ssub.s32 %s21, %s33
      %s143 = ssub.s32 %s22, %s29
      %s144 = sor.u32 %s142, %s143
      %p145 = scmp.eq.s32.totalorder %s144, 0
      %s147 = sadd.s32 %s146, 1
      %s148 = scalar_select %p145, %s146, %s147
      %p151 = pneg %p145
      %p152 = scmp.eq.s32.totalorder %s14, 3
      %p153 = por %p151, %p152
      %p154 = scmp.ne.s32.totalorder %s146, %s149
      %p155 = scmp.eq.s32.totalorder %s14, 0
      %p156 = por %p154, %p155
      %p157 = scmp.ne.s32.totalorder %s146, %s149
      %p158 = scmp.eq.s32.totalorder %s19, 3
      %p159 = por %p157, %p158
      %p160 = scmp.ne.s32.totalorder %s149, %s150
      %p161 = scmp.eq.s32.totalorder %s19, 0
      %p162 = por %p160, %p161
      %p163 = scmp.ne.s32.totalorder %s149, %s150
      %p164 = scmp.eq.s32.totalorder %s20, 3
      %p165 = por %p163, %p164
      %p167 = scmp.ne.s32.totalorder %s150, %s166
      %p168 = scmp.eq.s32.totalorder %s20, 0
      %p169 = por %p167, %p168
      %p170 = scmp.le.s32.totalorder 1, %s14
      %p171 = scmp.lt.s32.totalorder %s14, 5
      %p172 = pnand %p170, %p171
      %p173 = pneg %p172
      // Predicated region
      $region9: #{tpu_custom_call.1} parent=5 // pred_check
        _
      $region10: #{tpu_custom_call.1} parent=5 // pred_check_branch
        %175 = sbr.rel (%p172) target = $region12
      $region11: #{tpu_custom_call.1} parent=5 // pred_region
        %s176 = ssub.s32 %s14, 1
      $region12: #{tpu_custom_call.1} parent=5 // pred_fallthru
        _
      %p177 = scmp.lt.s32.totalorder %s14, 4
      // Predicated region
      $region13: #{tpu_custom_call.1} parent=5 // pred_check
        %p178 = pneg %p177
      $region14: #{tpu_custom_call.1} parent=5 // pred_check_branch
        %180 = sbr.rel (%p178) target = $region16
      $region15: #{tpu_custom_call.1} parent=5 // pred_region
        // Predicated region
        $region17: #{tpu_custom_call.1} parent=15 // pred_check
          %p181 = pneg %p48
        $region18: #{tpu_custom_call.1} parent=15 // pred_check_branch
          %183 = sbr.rel (%p181) target = $region20
        $region19: #{tpu_custom_call.1} parent=15 // pred_region
          %s184 = smul.u32 32, %s22
          %p185 = scmp.lt.s32.totalorder %s21, 1
          %s186 = scalar_select %p185, %s21, 1
          %p187 = scmp.lt.s32.totalorder %s184, 63
          %s188 = scalar_select %p187, %s184, 63
          %s189 = smul.addr %s186, 64
          %s190 = sadd.s32 %s188, %s189
          %s191 = smul.addr %s190, 4
          %s192 = scalar_lea.vmem %s0, %s191
          %s193 = smul.u32 32, %s22
        $region20: #{tpu_custom_call.1} parent=15 // pred_fallthru
          _
        // Predicated region
        $region21: #{tpu_custom_call.1} parent=15 // pred_check
          %p194 = pneg %p74
        $region22: #{tpu_custom_call.1} parent=15 // pred_check_branch
          %196 = sbr.rel (%p194) target = $region24
        $region23: #{tpu_custom_call.1} parent=15 // pred_region
          %p197 = scmp.lt.s32.totalorder %s21, 1
          %s198 = scalar_select %p197, %s21, 1
          %s199 = smul.addr %s198, 16
          %s200 = smul.addr %s199, 4
          %s201 = scalar_lea.vmem %s1, %s200
        $region24: #{tpu_custom_call.1} parent=15 // pred_fallthru
          _
        // Predicated region
        $region25: #{tpu_custom_call.1} parent=15 // pred_check
          %p202 = pneg %p100
        $region26: #{tpu_custom_call.1} parent=15 // pred_check_branch
          %204 = sbr.rel (%p202) target = $region28
        $region27: #{tpu_custom_call.1} parent=15 // pred_region
          %p205 = scmp.lt.s32.totalorder %s21, 1
          %s206 = scalar_select %p205, %s21, 1
          %s207 = smul.addr %s206, 16
          %s208 = smul.addr %s207, 4
          %s209 = scalar_lea.vmem %s2, %s208
        $region28: #{tpu_custom_call.1} parent=15 // pred_fallthru
          _
      $region16: #{tpu_custom_call.1} parent=5 // pred_fallthru
        _
      %p210 = scmp.le.s32.totalorder 1, %s14
      %p211 = scmp.lt.s32.totalorder %s14, 5
      %p212 = pnand %p210, %p211
      %p213 = pneg %p212
      // Predicated region
      $region29: #{tpu_custom_call.1} parent=5 // pred_check
        _
      $region30: #{tpu_custom_call.1} parent=5 // pred_check_branch
        %215 = sbr.rel (%p212) target = $region32
      $region31: #{tpu_custom_call.1} parent=5 // pred_region
        %s216 = ssub.s32 %s14, 1
        %s217 = smul.u32 32, %s24
        %p218 = scmp.lt.s32.totalorder %s23, 1
        %s219 = scalar_select %p218, %s23, 1
        %p220 = scmp.lt.s32.totalorder %s217, 63
        %s221 = scalar_select %p220, %s217, 63
        %s222 = smul.addr %s219, 64
        %s223 = sadd.s32 %s221, %s222
        %s224 = smul.addr %s223, 4
        %s225 = scalar_lea.vmem %s0, %s224
        %p226 = pneg %p54
        %p227 = pneg %p51
        %p228 = scmp.lt.s32.totalorder %s23, 1
        %s229 = scalar_select %p228, %s23, 1
        %s230 = smul.addr %s229, 16
        %s231 = smul.addr %s230, 4
        %s232 = scalar_lea.vmem %s1, %s231
        %p233 = pneg %p80
        %p234 = pneg %p77
        %p235 = scmp.lt.s32.totalorder %s23, 1
        %s236 = scalar_select %p235, %s23, 1
        %s237 = smul.addr %s236, 16
        %s238 = smul.addr %s237, 4
        %s239 = scalar_lea.vmem %s2, %s238
        %p240 = pneg %p106
        %p241 = pneg %p103
        %p242 = pneg %p134
        %p243 = pneg %p131
        %s244 = smul.u32 32, %s24
        %p245 = scmp.lt.s32.totalorder %s23, 1
        %s246 = scalar_select %p245, %s23, 1
        %p247 = scmp.lt.s32.totalorder %s244, 63
        %s248 = scalar_select %p247, %s244, 63
        %s249 = smul.addr %s246, 64
        %s250 = sadd.s32 %s248, %s249
        %s251 = smul.addr %s250, 4
        %s252 = scalar_lea.vmem %s3, %s251
        %p253 = pneg %p162
        %p254 = pneg %p159
        %s255 = sand.u32 %s149, 1
        %s256 = scalar_lea.sflag [#allocation3], %s255
        %s257 = sand.u32 %s149, 1
        %s258 = smul.addr %s257, 128
        %s259 = scalar_lea.vmem [#allocation2], %s258
        %s260 = smul.u32 32, %s24
        %p261 = scmp.lt.s32.totalorder %s23, 1
        %s262 = scalar_select %p261, %s23, 1
        %p263 = scmp.lt.s32.totalorder %s260, 63
        %s264 = scalar_select %p263, %s260, 63
        %s265 = smul.addr %s262, 64
        %s266 = sadd.s32 %s264, %s265
        %s267 = smul.addr %s266, 4
        %s268 = scalar_lea.vmem %s0, %s267
        %s269 = smul.u32 32, %s24
        %p270 = scmp.lt.s32.totalorder %s23, 1
        %s271 = scalar_select %p270, %s23, 1
        %s272 = smul.addr %s271, 16
        %s273 = smul.addr %s272, 4
        %s274 = scalar_lea.vmem %s1, %s273
        %p275 = scmp.lt.s32.totalorder %s23, 1
        %s276 = scalar_select %p275, %s23, 1
        %s277 = smul.addr %s276, 16
        %s278 = smul.addr %s277, 4
        %s279 = scalar_lea.vmem %s2, %s278
        %s280 = smul.u32 32, %s24
        %p281 = scmp.lt.s32.totalorder %s23, 1
        %s282 = scalar_select %p281, %s23, 1
        %p283 = scmp.lt.s32.totalorder %s280, 63
        %s284 = scalar_select %p283, %s280, 63
        %s285 = smul.addr %s282, 64
        %s286 = sadd.s32 %s284, %s285
        %s287 = smul.addr %s286, 4
        %s288 = scalar_lea.vmem %s3, %s287
        %s289 = smul.u32 32, %s24
        %s290 = smul.u32 32, %s24
        %v293 = vld [vmem:[%s268] sm:$0xf]
        %v294 = vld [vmem:[%s268 + $0x4] sm:$0xf]
        %v295 = vld [vmem:[%s268 + $0x8] sm:$0xf]
        %v296 = vld [vmem:[%s268 + $0xc] sm:$0xf]
        %v297 = vld [vmem:[%s268 + $0x10] sm:$0xf]
        %v298 = vld [vmem:[%s268 + $0x14] sm:$0xf]
        %v299 = vld [vmem:[%s268 + $0x18] sm:$0xf]
        %v300 = vld [vmem:[%s268 + $0x1c] sm:$0xf]
        %v301 = vld [vmem:[%s268 + $0x20] sm:$0xf]
        %v302 = vld [vmem:[%s268 + $0x24] sm:$0xf]
        %v303 = vld [vmem:[%s268 + $0x28] sm:$0xf]
        %v304 = vld [vmem:[%s268 + $0x2c] sm:$0xf]
        %v305 = vld [vmem:[%s268 + $0x30] sm:$0xf]
        %v306 = vld [vmem:[%s268 + $0x34] sm:$0xf]
        %v307 = vld [vmem:[%s268 + $0x38] sm:$0xf]
        %v308 = vld [vmem:[%s268 + $0x3c] sm:$0xf]
        %v309 = vld [vmem:[%s268 + $0x40] sm:$0xf]
        %v310 = vld [vmem:[%s268 + $0x44] sm:$0xf]
        %v311 = vld [vmem:[%s268 + $0x48] sm:$0xf]
        %v312 = vld [vmem:[%s268 + $0x4c] sm:$0xf]
        %v313 = vld [vmem:[%s268 + $0x50] sm:$0xf]
        %v314 = vld [vmem:[%s268 + $0x54] sm:$0xf]
        %v315 = vld [vmem:[%s268 + $0x58] sm:$0xf]
        %v316 = vld [vmem:[%s268 + $0x5c] sm:$0xf]
        %v317 = vld [vmem:[%s268 + $0x60] sm:$0xf]
        %v318 = vld [vmem:[%s268 + $0x64] sm:$0xf]
        %v319 = vld [vmem:[%s268 + $0x68] sm:$0xf]
        %v320 = vld [vmem:[%s268 + $0x6c] sm:$0xf]
        %v321 = vld [vmem:[%s268 + $0x70] sm:$0xf]
        %v322 = vld [vmem:[%s268 + $0x74] sm:$0xf]
        %v323 = vld [vmem:[%s268 + $0x78] sm:$0xf]
        %v324 = vld [vmem:[%s268 + $0x7c] sm:$0xf]
        %v325 = vmul.bf16 %v293, 1040203264
        %v326 = vmul.bf16 %v294, 1040203264
        %v327 = vmul.bf16 %v295, 1040203264
        %v328 = vmul.bf16 %v296, 1040203264
        %v329 = vmul.bf16 %v297, 1040203264
        %v330 = vmul.bf16 %v298, 1040203264
        %v331 = vmul.bf16 %v299, 1040203264
        %v332 = vmul.bf16 %v300, 1040203264
        %v333 = vmul.bf16 %v301, 1040203264
        %v334 = vmul.bf16 %v302, 1040203264
        %v335 = vmul.bf16 %v303, 1040203264
        %v336 = vmul.bf16 %v304, 1040203264
        %v337 = vmul.bf16 %v305, 1040203264
        %v338 = vmul.bf16 %v306, 1040203264
        %v339 = vmul.bf16 %v307, 1040203264
        %v340 = vmul.bf16 %v308, 1040203264
        %v341 = vmul.bf16 %v309, 1040203264
        %v342 = vmul.bf16 %v310, 1040203264
        %v343 = vmul.bf16 %v311, 1040203264
        %v344 = vmul.bf16 %v312, 1040203264
        %v345 = vmul.bf16 %v313, 1040203264
        %v346 = vmul.bf16 %v314, 1040203264
        %v347 = vmul.bf16 %v315, 1040203264
        %v348 = vmul.bf16 %v316, 1040203264
        %v349 = vmul.bf16 %v317, 1040203264
        %v350 = vmul.bf16 %v318, 1040203264
        %v351 = vmul.bf16 %v319, 1040203264
        %v352 = vmul.bf16 %v320, 1040203264
        %v353 = vmul.bf16 %v321, 1040203264
        %v354 = vmul.bf16 %v322, 1040203264
        %v355 = vmul.bf16 %v323, 1040203264
        %v356 = vmul.bf16 %v324, 1040203264
        %v357 = vld [vmem:[%s274] sm:$0xf]
        %v358 = vld [vmem:[%s274 + $0x4] sm:$0xf]
        %v359 = vld [vmem:[%s274 + $0x8] sm:$0xf]
        %v360 = vld [vmem:[%s274 + $0xc] sm:$0xf]
        %v361 = vld [vmem:[%s274 + $0x10] sm:$0xf]
        %v362 = vld [vmem:[%s274 + $0x14] sm:$0xf]
        %v363 = vld [vmem:[%s274 + $0x18] sm:$0xf]
        %v364 = vld [vmem:[%s274 + $0x1c] sm:$0xf]
        %v365 = vld [vmem:[%s274 + $0x20] sm:$0xf]
        %v366 = vld [vmem:[%s274 + $0x24] sm:$0xf]
        %v367 = vld [vmem:[%s274 + $0x28] sm:$0xf]
        %v368 = vld [vmem:[%s274 + $0x2c] sm:$0xf]
        %v369 = vld [vmem:[%s274 + $0x30] sm:$0xf]
        %v370 = vld [vmem:[%s274 + $0x34] sm:$0xf]
        %v371 = vld [vmem:[%s274 + $0x38] sm:$0xf]
        %v372 = vld [vmem:[%s274 + $0x3c] sm:$0xf]
        %v405 = vunpack.c.l.b16 %v325
        %v406 = vunpack.c.l.b16 %v326
        %v407 = vunpack.c.l.b16 %v327
        %v408 = vunpack.c.l.b16 %v328
        %v409 = vunpack.c.l.b16 %v329
        %v410 = vunpack.c.l.b16 %v330
        %v411 = vunpack.c.l.b16 %v331
        %v412 = vunpack.c.l.b16 %v332
        %v413 = vunpack.c.l.b16 %v333
        %v414 = vunpack.c.l.b16 %v334
        %v415 = vunpack.c.l.b16 %v335
        %v416 = vunpack.c.l.b16 %v336
        %v417 = vunpack.c.l.b16 %v337
        %v418 = vunpack.c.l.b16 %v338
        %v419 = vunpack.c.l.b16 %v339
        %v420 = vunpack.c.l.b16 %v340
        %v421 = vunpack.c.l.b16 %v341
        %v422 = vunpack.c.l.b16 %v342
        %v423 = vunpack.c.l.b16 %v343
        %v424 = vunpack.c.l.b16 %v344
        %v425 = vunpack.c.l.b16 %v345
        %v426 = vunpack.c.l.b16 %v346
        %v427 = vunpack.c.l.b16 %v347
        %v428 = vunpack.c.l.b16 %v348
        %v429 = vunpack.c.l.b16 %v349
        %v430 = vunpack.c.l.b16 %v350
        %v431 = vunpack.c.l.b16 %v351
        %v432 = vunpack.c.l.b16 %v352
        %v433 = vunpack.c.l.b16 %v353
        %v434 = vunpack.c.l.b16 %v354
        %v435 = vunpack.c.l.b16 %v355
        %v436 = vunpack.c.l.b16 %v356
        %v437 = vpack.c.b16 %v406, %v405
        %v438 = vpack.c.b16 %v408, %v407
        %v439 = vpack.c.b16 %v410, %v409
        %v440 = vpack.c.b16 %v412, %v411
        %v441 = vpack.c.b16 %v414, %v413
        %v442 = vpack.c.b16 %v416, %v415
        %v443 = vpack.c.b16 %v418, %v417
        %v444 = vpack.c.b16 %v420, %v419
        %v445 = vpack.c.b16 %v422, %v421
        %v446 = vpack.c.b16 %v424, %v423
        %v447 = vpack.c.b16 %v426, %v425
        %v448 = vpack.c.b16 %v428, %v427
        %v449 = vpack.c.b16 %v430, %v429
        %v450 = vpack.c.b16 %v432, %v431
        %v451 = vpack.c.b16 %v434, %v433
        %v452 = vpack.c.b16 %v436, %v435
        %v469 = vunpack.c.l.b16 %v357
        %v470 = vunpack.c.l.b16 %v358
        %v471 = vunpack.c.l.b16 %v359
        %v472 = vunpack.c.l.b16 %v360
        %v473 = vunpack.c.l.b16 %v361
        %v474 = vunpack.c.l.b16 %v362
        %v475 = vunpack.c.l.b16 %v363
        %v476 = vunpack.c.l.b16 %v364
        %v477 = vunpack.c.l.b16 %v365
        %v478 = vunpack.c.l.b16 %v366
        %v479 = vunpack.c.l.b16 %v367
        %v480 = vunpack.c.l.b16 %v368
        %v481 = vunpack.c.l.b16 %v369
        %v482 = vunpack.c.l.b16 %v370
        %v483 = vunpack.c.l.b16 %v371
        %v484 = vunpack.c.l.b16 %v372
        %v485 = vpack.c.b16 %v470, %v469
        %v486 = vpack.c.b16 %v472, %v471
        %v487 = vpack.c.b16 %v474, %v473
        %v488 = vpack.c.b16 %v476, %v475
        %v489 = vpack.c.b16 %v478, %v477
        %v490 = vpack.c.b16 %v480, %v479
        %v491 = vpack.c.b16 %v482, %v481
        %v492 = vpack.c.b16 %v484, %v483
        %vm493 = vcmask 523264
        %v495 = vsel %vm493, %v437, 0
        %v498 = vsel %vm493, %v438, 0
        %v501 = vsel %vm493, %v439, 0
        %v504 = vsel %vm493, %v440, 0
        %v507 = vsel %vm493, %v441, 0
        %v510 = vsel %vm493, %v442, 0
        %v513 = vsel %vm493, %v443, 0
        %v516 = vsel %vm493, %v444, 0
        %v519 = vsel %vm493, %v445, 0
        %v522 = vsel %vm493, %v446, 0
        %v525 = vsel %vm493, %v447, 0
        %v528 = vsel %vm493, %v448, 0
        %v531 = vsel %vm493, %v449, 0
        %v534 = vsel %vm493, %v450, 0
        %v537 = vsel %vm493, %v451, 0
        %v540 = vsel %vm493, %v452, 0
        %v543 = vsel %vm493, %v485, 0
        %v546 = vsel %vm493, %v486, 0
        %v549 = vsel %vm493, %v487, 0
        %v552 = vsel %vm493, %v488, 0
        %v555 = vsel %vm493, %v489, 0
        %v558 = vsel %vm493, %v490, 0
        %v561 = vsel %vm493, %v491, 0
        %v564 = vsel %vm493, %v492, 0
        %566 = vmatprep.subr.bf16.mxu0 0
        %567 = vmatpush1.bf16.xpose.msra.mxu0 %v543
        %568 = vmatprep.subr.bf16.mxu0 0
        %569 = vmatpush1.bf16.xpose.msra.mxu0 %v546
        %570 = vmatprep.subr.bf16.mxu0 0
        %571 = vmatpush1.bf16.xpose.msra.mxu0 %v549
        %572 = vmatprep.subr.bf16.mxu0 0
        %573 = vmatpush1.bf16.xpose.msra.mxu0 %v552
        %574 = vmatprep.subr.bf16.mxu0 0
        %575 = vmatpush1.bf16.xpose.msra.mxu0 %v555
        %576 = vmatprep.subr.bf16.mxu0 0
        %577 = vmatpush1.bf16.xpose.msra.mxu0 %v558
        %578 = vmatprep.subr.bf16.mxu0 0
        %579 = vmatpush1.bf16.xpose.msra.mxu0 %v561
        %580 = vmatprep.subr.bf16.mxu0 0
        %581 = vmatpush1.bf16.xpose.msra.mxu0 %v564
        %582 = vmatprep.subr.bf16.mxu0 0
        %583 = vmatpush1.bf16.xpose.msra.mxu0 0
        %584 = vmatprep.subr.bf16.mxu0 0
        %585 = vmatpush1.bf16.xpose.msra.mxu0 0
        %586 = vmatprep.subr.bf16.mxu0 0
        %587 = vmatpush1.bf16.xpose.msra.mxu0 0
        %588 = vmatprep.subr.bf16.mxu0 0
        %589 = vmatpush1.bf16.xpose.msra.mxu0 0
        %590 = vmatprep.subr.bf16.mxu0 0
        %591 = vmatpush1.bf16.xpose.msra.mxu0 0
        %592 = vmatprep.subr.bf16.mxu0 0
        %593 = vmatpush1.bf16.xpose.msra.mxu0 0
        %594 = vmatprep.subr.bf16.mxu0 0
        %595 = vmatpush1.bf16.xpose.msra.mxu0 0
        %596 = vmatprep.subr.bf16.mxu0 0
        %597 = vmatpush1.bf16.xpose.msra.mxu0 0
        %598 = vmatprep.mubr.bf16.mxu0 0
        %599 = vmatmul.mubr.bf16.gmra.mrb[0].mxu0 %v495
        %v600 = vpop.f32.mrb[0].mxu0
        %v601 = vadd.f32 0.0, %v600
        %v602 = vpop.f32.mrb[0].mxu0
        %v603 = vpop.f32.mrb[0].mxu0
        %v604 = vadd.f32 0.0, %v603
        %v605 = vpop.f32.mrb[0].mxu0
        %606 = vmatprep.mubr.bf16.mxu0 0
        %607 = vmatmul.mubr.bf16.gmra.mrb[0].mxu0 %v498
        %v608 = vpop.f32.mrb[0].mxu0
        %v609 = vadd.f32 0.0, %v608
        %v610 = vpop.f32.mrb[0].mxu0
        %v611 = vpop.f32.mrb[0].mxu0
        %v612 = vadd.f32 0.0, %v611
        %v613 = vpop.f32.mrb[0].mxu0
        %614 = vmatprep.mubr.bf16.mxu0 0
        %615 = vmatmul.mubr.bf16.gmra.mrb[0].mxu0 %v501
        %v616 = vpop.f32.mrb[0].mxu0
        %v617 = vadd.f32 0.0, %v616
        %v618 = vpop.f32.mrb[0].mxu0
        %v619 = vpop.f32.mrb[0].mxu0
        %v620 = vadd.f32 0.0, %v619
        %v621 = vpop.f32.mrb[0].mxu0
        %622 = vmatprep.mubr.bf16.mxu0 0
        %623 = vmatmul.mubr.bf16.gmra.mrb[0].mxu0 %v504
        %v624 = vpop.f32.mrb[0].mxu0
        %v625 = vadd.f32 0.0, %v624
        %v626 = vpop.f32.mrb[0].mxu0
        %v627 = vpop.f32.mrb[0].mxu0
        %v628 = vadd.f32 0.0, %v627
        %v629 = vpop.f32.mrb[0].mxu0
        %630 = vmatprep.mubr.bf16.mxu0 0
        %631 = vmatmul.mubr.bf16.gmra.mrb[0].mxu0 %v507
        %v632 = vpop.f32.mrb[0].mxu0
        %v633 = vadd.f32 0.0, %v632
        %v634 = vpop.f32.mrb[0].mxu0
        %v635 = vpop.f32.mrb[0].mxu0
        %v636 = vadd.f32 0.0, %v635
        %v637 = vpop.f32.mrb[0].mxu0
        %638 = vmatprep.mubr.bf16.mxu0 0
        %639 = vmatmul.mubr.bf16.gmra.mrb[0].mxu0 %v510
        %v640 = vpop.f32.mrb[0].mxu0
        %v641 = vadd.f32 0.0, %v640
        %v642 = vpop.f32.mrb[0].mxu0
        %v643 = vpop.f32.mrb[0].mxu0
        %v644 = vadd.f32 0.0, %v643
        %v645 = vpop.f32.mrb[0].mxu0
        %646 = vmatprep.mubr.bf16.mxu0 0
        %647 = vmatmul.mubr.bf16.gmra.mrb[0].mxu0 %v513
        %v648 = vpop.f32.mrb[0].mxu0
        %v649 = vadd.f32 0.0, %v648
        %v650 = vpop.f32.mrb[0].mxu0
        %v651 = vpop.f32.mrb[0].mxu0
        %v652 = vadd.f32 0.0, %v651
        %v653 = vpop.f32.mrb[0].mxu0
        %654 = vmatprep.mubr.bf16.mxu0 0
        %655 = vmatmul.mubr.bf16.gmra.mrb[0].mxu0 %v516
        %v656 = vpop.f32.mrb[0].mxu0
        %v657 = vadd.f32 0.0, %v656
        %v658 = vpop.f32.mrb[0].mxu0
        %v659 = vpop.f32.mrb[0].mxu0
        %v660 = vadd.f32 0.0, %v659
        %v661 = vpop.f32.mrb[0].mxu0
        %662 = vmatprep.mubr.bf16.mxu0 0
        %663 = vmatmul.mubr.bf16.gmra.mrb[0].mxu0 %v519
        %v664 = vpop.f32.mrb[0].mxu0
        %v665 = vadd.f32 0.0, %v664
        %v666 = vpop.f32.mrb[0].mxu0
        %v667 = vpop.f32.mrb[0].mxu0
        %v668 = vadd.f32 0.0, %v667
        %v669 = vpop.f32.mrb[0].mxu0
        %670 = vmatprep.mubr.bf16.mxu0 0
        %671 = vmatmul.mubr.bf16.gmra.mrb[0].mxu0 %v522
        %v672 = vpop.f32.mrb[0].mxu0
        %v673 = vadd.f32 0.0, %v672
        %v674 = vpop.f32.mrb[0].mxu0
        %v675 = vpop.f32.mrb[0].mxu0
        %v676 = vadd.f32 0.0, %v675
        %v677 = vpop.f32.mrb[0].mxu0
        %678 = vmatprep.mubr.bf16.mxu0 0
        %679 = vmatmul.mubr.bf16.gmra.mrb[0].mxu0 %v525
        %v680 = vpop.f32.mrb[0].mxu0
        %v681 = vadd.f32 0.0, %v680
        %v682 = vpop.f32.mrb[0].mxu0
        %v683 = vpop.f32.mrb[0].mxu0
        %v684 = vadd.f32 0.0, %v683
        %v685 = vpop.f32.mrb[0].mxu0
        %686 = vmatprep.mubr.bf16.mxu0 0
        %687 = vmatmul.mubr.bf16.gmra.mrb[0].mxu0 %v528
        %v688 = vpop.f32.mrb[0].mxu0
        %v689 = vadd.f32 0.0, %v688
        %v690 = vpop.f32.mrb[0].mxu0
        %v691 = vpop.f32.mrb[0].mxu0
        %v692 = vadd.f32 0.0, %v691
        %v693 = vpop.f32.mrb[0].mxu0
        %694 = vmatprep.mubr.bf16.mxu0 0
        %695 = vmatmul.mubr.bf16.gmra.mrb[0].mxu0 %v531
        %v696 = vpop.f32.mrb[0].mxu0
        %v697 = vadd.f32 0.0, %v696
        %v698 = vpop.f32.mrb[0].mxu0
        %v699 = vpop.f32.mrb[0].mxu0
        %v700 = vadd.f32 0.0, %v699
        %v701 = vpop.f32.mrb[0].mxu0
        %702 = vmatprep.mubr.bf16.mxu0 0
        %703 = vmatmul.mubr.bf16.gmra.mrb[0].mxu0 %v534
        %v704 = vpop.f32.mrb[0].mxu0
        %v705 = vadd.f32 0.0, %v704
        %v706 = vpop.f32.mrb[0].mxu0
        %v707 = vpop.f32.mrb[0].mxu0
        %v708 = vadd.f32 0.0, %v707
        %v709 = vpop.f32.mrb[0].mxu0
        %710 = vmatprep.mubr.bf16.mxu0 0
        %711 = vmatmul.mubr.bf16.gmra.mrb[0].mxu0 %v537
        %v712 = vpop.f32.mrb[0].mxu0
        %v713 = vadd.f32 0.0, %v712
        %v714 = vpop.f32.mrb[0].mxu0
        %v715 = vpop.f32.mrb[0].mxu0
        %v716 = vadd.f32 0.0, %v715
        %v717 = vpop.f32.mrb[0].mxu0
        %718 = vmatprep.mubr.bf16.mxu0 0
        %719 = vmatmul.mubr.bf16.gmra.mrb[0].mxu0 %v540
        %v720 = vpop.f32.mrb[0].mxu0
        %v721 = vadd.f32 0.0, %v720
        %v722 = vpop.f32.mrb[0].mxu0
        %v723 = vpop.f32.mrb[0].mxu0
        %v724 = vadd.f32 0.0, %v723
        %v725 = vpop.f32.mrb[0].mxu0
        %726 = vdwg.mxu0
        %v727 = vld [vmem:[%s279] sm:$0xf]
        %v728 = vld [vmem:[%s279 + $0x4] sm:$0xf]
        %v729 = vld [vmem:[%s279 + $0x8] sm:$0xf]
        %v730 = vld [vmem:[%s279 + $0xc] sm:$0xf]
        %v731 = vld [vmem:[%s279 + $0x10] sm:$0xf]
        %v732 = vld [vmem:[%s279 + $0x14] sm:$0xf]
        %v733 = vld [vmem:[%s279 + $0x18] sm:$0xf]
        %v734 = vld [vmem:[%s279 + $0x1c] sm:$0xf]
        %v735 = vld [vmem:[%s279 + $0x20] sm:$0xf]
        %v736 = vld [vmem:[%s279 + $0x24] sm:$0xf]
        %v737 = vld [vmem:[%s279 + $0x28] sm:$0xf]
        %v738 = vld [vmem:[%s279 + $0x2c] sm:$0xf]
        %v739 = vld [vmem:[%s279 + $0x30] sm:$0xf]
        %v740 = vld [vmem:[%s279 + $0x34] sm:$0xf]
        %v741 = vld [vmem:[%s279 + $0x38] sm:$0xf]
        %v742 = vld [vmem:[%s279 + $0x3c] sm:$0xf]
        %743 = vmax.xlane.f32.xlu0 %v601
        %v744 = vpop.xlane.xlu0 %743
        %745 = vmax.xlane.f32.xlu0 %v604
        %v746 = vpop.xlane.xlu0 %745
        %747 = vmax.xlane.f32.xlu0 %v609
        %v748 = vpop.xlane.xlu0 %747
        %749 = vmax.xlane.f32.xlu0 %v612
        %v750 = vpop.xlane.xlu0 %749
        %751 = vmax.xlane.f32.xlu0 %v617
        %v752 = vpop.xlane.xlu0 %751
        %753 = vmax.xlane.f32.xlu0 %v620
        %v754 = vpop.xlane.xlu0 %753
        %755 = vmax.xlane.f32.xlu0 %v625
        %v756 = vpop.xlane.xlu0 %755
        %757 = vmax.xlane.f32.xlu0 %v628
        %v758 = vpop.xlane.xlu0 %757
        %759 = vmax.xlane.f32.xlu0 %v633
        %v760 = vpop.xlane.xlu0 %759
        %761 = vmax.xlane.f32.xlu0 %v636
        %v762 = vpop.xlane.xlu0 %761
        %763 = vmax.xlane.f32.xlu0 %v641
        %v764 = vpop.xlane.xlu0 %763
        %765 = vmax.xlane.f32.xlu0 %v644
        %v766 = vpop.xlane.xlu0 %765
        %767 = vmax.xlane.f32.xlu0 %v649
        %v768 = vpop.xlane.xlu0 %767
        %769 = vmax.xlane.f32.xlu0 %v652
        %v770 = vpop.xlane.xlu0 %769
        %771 = vmax.xlane.f32.xlu0 %v657
        %v772 = vpop.xlane.xlu0 %771
        %773 = vmax.xlane.f32.xlu0 %v660
        %v774 = vpop.xlane.xlu0 %773
        %775 = vmax.xlane.f32.xlu0 %v665
        %v776 = vpop.xlane.xlu0 %775
        %777 = vmax.xlane.f32.xlu0 %v668
        %v778 = vpop.xlane.xlu0 %777
        %779 = vmax.xlane.f32.xlu0 %v673
        %v780 = vpop.xlane.xlu0 %779
        %781 = vmax.xlane.f32.xlu0 %v676
        %v782 = vpop.xlane.xlu0 %781
        %783 = vmax.xlane.f32.xlu0 %v681
        %v784 = vpop.xlane.xlu0 %783
        %785 = vmax.xlane.f32.xlu0 %v684
        %v786 = vpop.xlane.xlu0 %785
        %787 = vmax.xlane.f32.xlu0 %v689
        %v788 = vpop.xlane.xlu0 %787
        %789 = vmax.xlane.f32.xlu0 %v692
        %v790 = vpop.xlane.xlu0 %789
        %791 = vmax.xlane.f32.xlu0 %v697
        %v792 = vpop.xlane.xlu0 %791
        %793 = vmax.xlane.f32.xlu0 %v700
        %v794 = vpop.xlane.xlu0 %793
        %795 = vmax.xlane.f32.xlu0 %v705
        %v796 = vpop.xlane.xlu0 %795
        %797 = vmax.xlane.f32.xlu0 %v708
        %v798 = vpop.xlane.xlu0 %797
        %799 = vmax.xlane.f32.xlu0 %v713
        %v800 = vpop.xlane.xlu0 %799
        %801 = vmax.xlane.f32.xlu0 %v716
        %v802 = vpop.xlane.xlu0 %801
        %803 = vmax.xlane.f32.xlu0 %v721
        %v804 = vpop.xlane.xlu0 %803
        %805 = vmax.xlane.f32.xlu0 %v724
        %v806 = vpop.xlane.xlu0 %805
        %v807 = vsub.f32 %v601, %v744
        %v808 = vsub.f32 %v604, %v746
        %v809 = vsub.f32 %v609, %v748
        %v810 = vsub.f32 %v612, %v750
        %v811 = vsub.f32 %v617, %v752
        %v812 = vsub.f32 %v620, %v754
        %v813 = vsub.f32 %v625, %v756
        %v814 = vsub.f32 %v628, %v758
        %v815 = vsub.f32 %v633, %v760
        %v816 = vsub.f32 %v636, %v762
        %v817 = vsub.f32 %v641, %v764
        %v818 = vsub.f32 %v644, %v766
        %v819 = vsub.f32 %v649, %v768
        %v820 = vsub.f32 %v652, %v770
        %v821 = vsub.f32 %v657, %v772
        %v822 = vsub.f32 %v660, %v774
        %v823 = vsub.f32 %v665, %v776
        %v824 = vsub.f32 %v668, %v778
        %v825 = vsub.f32 %v673, %v780
        %v826 = vsub.f32 %v676, %v782
        %v827 = vsub.f32 %v681, %v784
        %v828 = vsub.f32 %v684, %v786
        %v829 = vsub.f32 %v689, %v788
        %v830 = vsub.f32 %v692, %v790
        %v831 = vsub.f32 %v697, %v792
        %v832 = vsub.f32 %v700, %v794
        %v833 = vsub.f32 %v705, %v796
        %v834 = vsub.f32 %v708, %v798
        %v835 = vsub.f32 %v713, %v800
        %v836 = vsub.f32 %v716, %v802
        %v837 = vsub.f32 %v721, %v804
        %v838 = vsub.f32 %v724, %v806
        %v839 = vmul.f32 %v807, 1.442695
        %v840 = vpow.pop %v839
        %v841 = vmul.f32 %v808, 1.442695
        %v842 = vpow.pop %v841
        %v843 = vmul.f32 %v809, 1.442695
        %v844 = vpow.pop %v843
        %v845 = vmul.f32 %v810, 1.442695
        %v846 = vpow.pop %v845
        %v847 = vmul.f32 %v811, 1.442695
        %v848 = vpow.pop %v847
        %v849 = vmul.f32 %v812, 1.442695
        %v850 = vpow.pop %v849
        %v851 = vmul.f32 %v813, 1.442695
        %v852 = vpow.pop %v851
        %v853 = vmul.f32 %v814, 1.442695
        %v854 = vpow.pop %v853
        %v855 = vmul.f32 %v815, 1.442695
        %v856 = vpow.pop %v855
        %v857 = vmul.f32 %v816, 1.442695
        %v858 = vpow.pop %v857
        %v859 = vmul.f32 %v817, 1.442695
        %v860 = vpow.pop %v859
        %v861 = vmul.f32 %v818, 1.442695
        %v862 = vpow.pop %v861
        %v863 = vmul.f32 %v819, 1.442695
        %v864 = vpow.pop %v863
        %v865 = vmul.f32 %v820, 1.442695
        %v866 = vpow.pop %v865
        %v867 = vmul.f32 %v821, 1.442695
        %v868 = vpow.pop %v867
        %v869 = vmul.f32 %v822, 1.442695
        %v870 = vpow.pop %v869
        %v871 = vmul.f32 %v823, 1.442695
        %v872 = vpow.pop %v871
        %v873 = vmul.f32 %v824, 1.442695
        %v874 = vpow.pop %v873
        %v875 = vmul.f32 %v825, 1.442695
        %v876 = vpow.pop %v875
        %v877 = vmul.f32 %v826, 1.442695
        %v878 = vpow.pop %v877
        %v879 = vmul.f32 %v827, 1.442695
        %v880 = vpow.pop %v879
        %v881 = vmul.f32 %v828, 1.442695
        %v882 = vpow.pop %v881
        %v883 = vmul.f32 %v829, 1.442695
        %v884 = vpow.pop %v883
        %v885 = vmul.f32 %v830, 1.442695
        %v886 = vpow.pop %v885
        %v887 = vmul.f32 %v831, 1.442695
        %v888 = vpow.pop %v887
        %v889 = vmul.f32 %v832, 1.442695
        %v890 = vpow.pop %v889
        %v891 = vmul.f32 %v833, 1.442695
        %v892 = vpow.pop %v891
        %v893 = vmul.f32 %v834, 1.442695
        %v894 = vpow.pop %v893
        %v895 = vmul.f32 %v835, 1.442695
        %v896 = vpow.pop %v895
        %v897 = vmul.f32 %v836, 1.442695
        %v898 = vpow.pop %v897
        %v899 = vmul.f32 %v837, 1.442695
        %v900 = vpow.pop %v899
        %v901 = vmul.f32 %v838, 1.442695
        %v902 = vpow.pop %v901
        %903 = vadd.xlane.f32.xlu0 %v840
        %v904 = vpop.xlane.xlu0 %903
        %905 = vadd.xlane.f32.xlu0 %v842
        %v906 = vpop.xlane.xlu0 %905
        %907 = vadd.xlane.f32.xlu0 %v844
        %v908 = vpop.xlane.xlu0 %907
        %909 = vadd.xlane.f32.xlu0 %v846
        %v910 = vpop.xlane.xlu0 %909
        %911 = vadd.xlane.f32.xlu0 %v848
        %v912 = vpop.xlane.xlu0 %911
        %913 = vadd.xlane.f32.xlu0 %v850
        %v914 = vpop.xlane.xlu0 %913
        %915 = vadd.xlane.f32.xlu0 %v852
        %v916 = vpop.xlane.xlu0 %915
        %917 = vadd.xlane.f32.xlu0 %v854
        %v918 = vpop.xlane.xlu0 %917
        %919 = vadd.xlane.f32.xlu0 %v856
        %v920 = vpop.xlane.xlu0 %919
        %921 = vadd.xlane.f32.xlu0 %v858
        %v922 = vpop.xlane.xlu0 %921
        %923 = vadd.xlane.f32.xlu0 %v860
        %v924 = vpop.xlane.xlu0 %923
        %925 = vadd.xlane.f32.xlu0 %v862
        %v926 = vpop.xlane.xlu0 %925
        %927 = vadd.xlane.f32.xlu0 %v864
        %v928 = vpop.xlane.xlu0 %927
        %929 = vadd.xlane.f32.xlu0 %v866
        %v930 = vpop.xlane.xlu0 %929
        %931 = vadd.xlane.f32.xlu0 %v868
        %v932 = vpop.xlane.xlu0 %931
        %933 = vadd.xlane.f32.xlu0 %v870
        %v934 = vpop.xlane.xlu0 %933
        %935 = vadd.xlane.f32.xlu0 %v872
        %v936 = vpop.xlane.xlu0 %935
        %937 = vadd.xlane.f32.xlu0 %v874
        %v938 = vpop.xlane.xlu0 %937
        %939 = vadd.xlane.f32.xlu0 %v876
        %v940 = vpop.xlane.xlu0 %939
        %941 = vadd.xlane.f32.xlu0 %v878
        %v942 = vpop.xlane.xlu0 %941
        %943 = vadd.xlane.f32.xlu0 %v880
        %v944 = vpop.xlane.xlu0 %943
        %945 = vadd.xlane.f32.xlu0 %v882
        %v946 = vpop.xlane.xlu0 %945
        %947 = vadd.xlane.f32.xlu0 %v884
        %v948 = vpop.xlane.xlu0 %947
        %949 = vadd.xlane.f32.xlu0 %v886
        %v950 = vpop.xlane.xlu0 %949
        %951 = vadd.xlane.f32.xlu0 %v888
        %v952 = vpop.xlane.xlu0 %951
        %953 = vadd.xlane.f32.xlu0 %v890
        %v954 = vpop.xlane.xlu0 %953
        %955 = vadd.xlane.f32.xlu0 %v892
        %v956 = vpop.xlane.xlu0 %955
        %957 = vadd.xlane.f32.xlu0 %v894
        %v958 = vpop.xlane.xlu0 %957
        %959 = vadd.xlane.f32.xlu0 %v896
        %v960 = vpop.xlane.xlu0 %959
        %961 = vadd.xlane.f32.xlu0 %v898
        %v962 = vpop.xlane.xlu0 %961
        %963 = vadd.xlane.f32.xlu0 %v900
        %v964 = vpop.xlane.xlu0 %963
        %965 = vadd.xlane.f32.xlu0 %v902
        %v966 = vpop.xlane.xlu0 %965
        %v967 = vrcp.pop %v904
        %v968 = vrcp.pop %v906
        %v969 = vrcp.pop %v908
        %v970 = vrcp.pop %v910
        %v971 = vrcp.pop %v912
        %v972 = vrcp.pop %v914
        %v973 = vrcp.pop %v916
        %v974 = vrcp.pop %v918
        %v975 = vrcp.pop %v920
        %v976 = vrcp.pop %v922
        %v977 = vrcp.pop %v924
        %v978 = vrcp.pop %v926
        %v979 = vrcp.pop %v928
        %v980 = vrcp.pop %v930
        %v981 = vrcp.pop %v932
        %v982 = vrcp.pop %v934
        %v983 = vrcp.pop %v936
        %v984 = vrcp.pop %v938
        %v985 = vrcp.pop %v940
        %v986 = vrcp.pop %v942
        %v987 = vrcp.pop %v944
        %v988 = vrcp.pop %v946
        %v989 = vrcp.pop %v948
        %v990 = vrcp.pop %v950
        %v991 = vrcp.pop %v952
        %v992 = vrcp.pop %v954
        %v993 = vrcp.pop %v956
        %v994 = vrcp.pop %v958
        %v995 = vrcp.pop %v960
        %v996 = vrcp.pop %v962
        %v997 = vrcp.pop %v964
        %v998 = vrcp.pop %v966
        %v999 = vmul.f32 %v840, %v967
        %v1000 = vmul.f32 %v842, %v968
        %v1001 = vmul.f32 %v844, %v969
        %v1002 = vmul.f32 %v846, %v970
        %v1003 = vmul.f32 %v848, %v971
        %v1004 = vmul.f32 %v850, %v972
        %v1005 = vmul.f32 %v852, %v973
        %v1006 = vmul.f32 %v854, %v974
        %v1007 = vmul.f32 %v856, %v975
        %v1008 = vmul.f32 %v858, %v976
        %v1009 = vmul.f32 %v860, %v977
        %v1010 = vmul.f32 %v862, %v978
        %v1011 = vmul.f32 %v864, %v979
        %v1012 = vmul.f32 %v866, %v980
        %v1013 = vmul.f32 %v868, %v981
        %v1014 = vmul.f32 %v870, %v982
        %v1015 = vmul.f32 %v872, %v983
        %v1016 = vmul.f32 %v874, %v984
        %v1017 = vmul.f32 %v876, %v985
        %v1018 = vmul.f32 %v878, %v986
        %v1019 = vmul.f32 %v880, %v987
        %v1020 = vmul.f32 %v882, %v988
        %v1021 = vmul.f32 %v884, %v989
        %v1022 = vmul.f32 %v886, %v990
        %v1023 = vmul.f32 %v888, %v991
        %v1024 = vmul.f32 %v890, %v992
        %v1025 = vmul.f32 %v892, %v993
        %v1026 = vmul.f32 %v894, %v994
        %v1027 = vmul.f32 %v896, %v995
        %v1028 = vmul.f32 %v898, %v996
        %v1029 = vmul.f32 %v900, %v997
        %v1030 = vmul.f32 %v902, %v998
        %v1031 = vpack.c.bf16 %v1000, %v999
        %v1032 = vpack.c.bf16 %v1002, %v1001
        %v1033 = vpack.c.bf16 %v1004, %v1003
        %v1034 = vpack.c.bf16 %v1006, %v1005
        %v1035 = vpack.c.bf16 %v1008, %v1007
        %v1036 = vpack.c.bf16 %v1010, %v1009
        %v1037 = vpack.c.bf16 %v1012, %v1011
        %v1038 = vpack.c.bf16 %v1014, %v1013
        %v1039 = vpack.c.bf16 %v1016, %v1015
        %v1040 = vpack.c.bf16 %v1018, %v1017
        %v1041 = vpack.c.bf16 %v1020, %v1019
        %v1042 = vpack.c.bf16 %v1022, %v1021
        %v1043 = vpack.c.bf16 %v1024, %v1023
        %v1044 = vpack.c.bf16 %v1026, %v1025
        %v1045 = vpack.c.bf16 %v1028, %v1027
        %v1046 = vpack.c.bf16 %v1030, %v1029
        %v1063 = vunpack.c.l.b16 %v1031
        %v1064 = vunpack.c.h.b16 %v1031
        %v1065 = vunpack.c.l.b16 %v1032
        %v1066 = vunpack.c.h.b16 %v1032
        %v1067 = vunpack.c.l.b16 %v1033
        %v1068 = vunpack.c.h.b16 %v1033
        %v1069 = vunpack.c.l.b16 %v1034
        %v1070 = vunpack.c.h.b16 %v1034
        %v1071 = vunpack.c.l.b16 %v1035
        %v1072 = vunpack.c.h.b16 %v1035
        %v1073 = vunpack.c.l.b16 %v1036
        %v1074 = vunpack.c.h.b16 %v1036
        %v1075 = vunpack.c.l.b16 %v1037
        %v1076 = vunpack.c.h.b16 %v1037
        %v1077 = vunpack.c.l.b16 %v1038
        %v1078 = vunpack.c.h.b16 %v1038
        %v1079 = vunpack.c.l.b16 %v1039
        %v1080 = vunpack.c.h.b16 %v1039
        %v1081 = vunpack.c.l.b16 %v1040
        %v1082 = vunpack.c.h.b16 %v1040
        %v1083 = vunpack.c.l.b16 %v1041
        %v1084 = vunpack.c.h.b16 %v1041
        %v1085 = vunpack.c.l.b16 %v1042
        %v1086 = vunpack.c.h.b16 %v1042
        %v1087 = vunpack.c.l.b16 %v1043
        %v1088 = vunpack.c.h.b16 %v1043
        %v1089 = vunpack.c.l.b16 %v1044
        %v1090 = vunpack.c.h.b16 %v1044
        %v1091 = vunpack.c.l.b16 %v1045
        %v1092 = vunpack.c.h.b16 %v1045
        %v1093 = vunpack.c.l.b16 %v1046
        %v1094 = vunpack.c.h.b16 %v1046
        %v1095 = vpack.c.b16 %v1063, %v1063
        %v1096 = vpack.c.b16 %v1064, %v1064
        %v1097 = vpack.c.b16 %v1065, %v1065
        %v1098 = vpack.c.b16 %v1066, %v1066
        %v1099 = vpack.c.b16 %v1067, %v1067
        %v1100 = vpack.c.b16 %v1068, %v1068
        %v1101 = vpack.c.b16 %v1069, %v1069
        %v1102 = vpack.c.b16 %v1070, %v1070
        %v1103 = vpack.c.b16 %v1071, %v1071
        %v1104 = vpack.c.b16 %v1072, %v1072
        %v1105 = vpack.c.b16 %v1073, %v1073
        %v1106 = vpack.c.b16 %v1074, %v1074
        %v1107 = vpack.c.b16 %v1075, %v1075
        %v1108 = vpack.c.b16 %v1076, %v1076
        %v1109 = vpack.c.b16 %v1077, %v1077
        %v1110 = vpack.c.b16 %v1078, %v1078
        %v1111 = vpack.c.b16 %v1079, %v1079
        %v1112 = vpack.c.b16 %v1080, %v1080
        %v1113 = vpack.c.b16 %v1081, %v1081
        %v1114 = vpack.c.b16 %v1082, %v1082
        %v1115 = vpack.c.b16 %v1083, %v1083
        %v1116 = vpack.c.b16 %v1084, %v1084
        %v1117 = vpack.c.b16 %v1085, %v1085
        %v1118 = vpack.c.b16 %v1086, %v1086
        %v1119 = vpack.c.b16 %v1087, %v1087
        %v1120 = vpack.c.b16 %v1088, %v1088
        %v1121 = vpack.c.b16 %v1089, %v1089
        %v1122 = vpack.c.b16 %v1090, %v1090
        %v1123 = vpack.c.b16 %v1091, %v1091
        %v1124 = vpack.c.b16 %v1092, %v1092
        %v1125 = vpack.c.b16 %v1093, %v1093
        %v1126 = vpack.c.b16 %v1094, %v1094
        %1159 = vst [vmem:[%s259] sm:$0xf] %v1095
        %1160 = vst [vmem:[%s259 + $0x4] sm:$0xf] %v1096
        %1161 = vst [vmem:[%s259 + $0x8] sm:$0xf] %v1097
        %1162 = vst [vmem:[%s259 + $0xc] sm:$0xf] %v1098
        %1163 = vst [vmem:[%s259 + $0x10] sm:$0xf] %v1099
        %1164 = vst [vmem:[%s259 + $0x14] sm:$0xf] %v1100
        %1165 = vst [vmem:[%s259 + $0x18] sm:$0xf] %v1101
        %1166 = vst [vmem:[%s259 + $0x1c] sm:$0xf] %v1102
        %1167 = vst [vmem:[%s259 + $0x20] sm:$0xf] %v1103
        %1168 = vst [vmem:[%s259 + $0x24] sm:$0xf] %v1104
        %1169 = vst [vmem:[%s259 + $0x28] sm:$0xf] %v1105
        %1170 = vst [vmem:[%s259 + $0x2c] sm:$0xf] %v1106
        %1171 = vst [vmem:[%s259 + $0x30] sm:$0xf] %v1107
        %1172 = vst [vmem:[%s259 + $0x34] sm:$0xf] %v1108
        %1173 = vst [vmem:[%s259 + $0x38] sm:$0xf] %v1109
        %1174 = vst [vmem:[%s259 + $0x3c] sm:$0xf] %v1110
        %1175 = vst [vmem:[%s259 + $0x40] sm:$0xf] %v1111
        %1176 = vst [vmem:[%s259 + $0x44] sm:$0xf] %v1112
        %1177 = vst [vmem:[%s259 + $0x48] sm:$0xf] %v1113
        %1178 = vst [vmem:[%s259 + $0x4c] sm:$0xf] %v1114
        %1179 = vst [vmem:[%s259 + $0x50] sm:$0xf] %v1115
        %1180 = vst [vmem:[%s259 + $0x54] sm:$0xf] %v1116
        %1181 = vst [vmem:[%s259 + $0x58] sm:$0xf] %v1117
        %1182 = vst [vmem:[%s259 + $0x5c] sm:$0xf] %v1118
        %1183 = vst [vmem:[%s259 + $0x60] sm:$0xf] %v1119
        %1184 = vst [vmem:[%s259 + $0x64] sm:$0xf] %v1120
        %1185 = vst [vmem:[%s259 + $0x68] sm:$0xf] %v1121
        %1186 = vst [vmem:[%s259 + $0x6c] sm:$0xf] %v1122
        %1187 = vst [vmem:[%s259 + $0x70] sm:$0xf] %v1123
        %1188 = vst [vmem:[%s259 + $0x74] sm:$0xf] %v1124
        %1189 = vst [vmem:[%s259 + $0x78] sm:$0xf] %v1125
        %1190 = vst [vmem:[%s259 + $0x7c] sm:$0xf] %v1126
        %v1207 = vunpack.c.l.b16 %v727
        %v1208 = vunpack.c.l.b16 %v728
        %v1209 = vunpack.c.l.b16 %v729
        %v1210 = vunpack.c.l.b16 %v730
        %v1211 = vunpack.c.l.b16 %v731
        %v1212 = vunpack.c.l.b16 %v732
        %v1213 = vunpack.c.l.b16 %v733
        %v1214 = vunpack.c.l.b16 %v734
        %v1215 = vunpack.c.l.b16 %v735
        %v1216 = vunpack.c.l.b16 %v736
        %v1217 = vunpack.c.l.b16 %v737
        %v1218 = vunpack.c.l.b16 %v738
        %v1219 = vunpack.c.l.b16 %v739
        %v1220 = vunpack.c.l.b16 %v740
        %v1221 = vunpack.c.l.b16 %v741
        %v1222 = vunpack.c.l.b16 %v742
        %v1223 = vpack.c.b16 %v1208, %v1207
        %v1224 = vpack.c.b16 %v1210, %v1209
        %v1225 = vpack.c.b16 %v1212, %v1211
        %v1226 = vpack.c.b16 %v1214, %v1213
        %v1227 = vpack.c.b16 %v1216, %v1215
        %v1228 = vpack.c.b16 %v1218, %v1217
        %v1229 = vpack.c.b16 %v1220, %v1219
        %v1230 = vpack.c.b16 %v1222, %v1221
        %1239 = vmatprep.subr.bf16.mxu0 0
        %1240 = vmatpush1.bf16.msra.mxu0 %v1223
        %1241 = vmatprep.subr.bf16.mxu0 0
        %1242 = vmatpush1.bf16.msra.mxu0 %v1224
        %1243 = vmatprep.subr.bf16.mxu0 0
        %1244 = vmatpush1.bf16.msra.mxu0 %v1225
        %1245 = vmatprep.subr.bf16.mxu0 0
        %1246 = vmatpush1.bf16.msra.mxu0 %v1226
        %1247 = vmatprep.subr.bf16.mxu0 0
        %1248 = vmatpush1.bf16.msra.mxu0 %v1227
        %1249 = vmatprep.subr.bf16.mxu0 0
        %1250 = vmatpush1.bf16.msra.mxu0 %v1228
        %1251 = vmatprep.subr.bf16.mxu0 0
        %1252 = vmatpush1.bf16.msra.mxu0 %v1229
        %1253 = vmatprep.subr.bf16.mxu0 0
        %1254 = vmatpush1.bf16.msra.mxu0 %v1230
        %1255 = vmatprep.subr.bf16.mxu0 0
        %1256 = vmatpush1.bf16.msra.mxu0 0
        %1257 = vmatprep.subr.bf16.mxu0 0
        %1258 = vmatpush1.bf16.msra.mxu0 0
        %1259 = vmatprep.subr.bf16.mxu0 0
        %1260 = vmatpush1.bf16.msra.mxu0 0
        %1261 = vmatprep.subr.bf16.mxu0 0
        %1262 = vmatpush1.bf16.msra.mxu0 0
        %1263 = vmatprep.subr.bf16.mxu0 0
        %1264 = vmatpush1.bf16.msra.mxu0 0
        %1265 = vmatprep.subr.bf16.mxu0 0
        %1266 = vmatpush1.bf16.msra.mxu0 0
        %1267 = vmatprep.subr.bf16.mxu0 0
        %1268 = vmatpush1.bf16.msra.mxu0 0
        %1269 = vmatprep.subr.bf16.mxu0 0
        %1270 = vmatpush1.bf16.msra.mxu0 0
        %1271 = vmatprep.mubr.bf16.mxu0 0
        %1272 = vmatmul.mubr.bf16.gmra.mrb[0].mxu0 %v1031
        %v1273 = vpop.f32.mrb[0].mxu0
        %v1274 = vadd.f32 0.0, %v1273
        %v1275 = vpop.f32.mrb[0].mxu0
        %v1276 = vpop.f32.mrb[0].mxu0
        %v1277 = vadd.f32 0.0, %v1276
        %v1278 = vpop.f32.mrb[0].mxu0
        %1279 = vmatprep.mubr.bf16.mxu0 0
        %1280 = vmatmul.mubr.bf16.gmra.mrb[0].mxu0 %v1032
        %v1281 = vpop.f32.mrb[0].mxu0
        %v1282 = vadd.f32 0.0, %v1281
        %v1283 = vpop.f32.mrb[0].mxu0
        %v1284 = vpop.f32.mrb[0].mxu0
        %v1285 = vadd.f32 0.0, %v1284
        %v1286 = vpop.f32.mrb[0].mxu0
        %1287 = vmatprep.mubr.bf16.mxu0 0
        %1288 = vmatmul.mubr.bf16.gmra.mrb[0].mxu0 %v1033
        %v1289 = vpop.f32.mrb[0].mxu0
        %v1290 = vadd.f32 0.0, %v1289
        %v1291 = vpop.f32.mrb[0].mxu0
        %v1292 = vpop.f32.mrb[0].mxu0
        %v1293 = vadd.f32 0.0, %v1292
        %v1294 = vpop.f32.mrb[0].mxu0
        %1295 = vmatprep.mubr.bf16.mxu0 0
        %1296 = vmatmul.mubr.bf16.gmra.mrb[0].mxu0 %v1034
        %v1297 = vpop.f32.mrb[0].mxu0
        %v1298 = vadd.f32 0.0, %v1297
        %v1299 = vpop.f32.mrb[0].mxu0
        %v1300 = vpop.f32.mrb[0].mxu0
        %v1301 = vadd.f32 0.0, %v1300
        %v1302 = vpop.f32.mrb[0].mxu0
        %1303 = vmatprep.mubr.bf16.mxu0 0
        %1304 = vmatmul.mubr.bf16.gmra.mrb[0].mxu0 %v1035
        %v1305 = vpop.f32.mrb[0].mxu0
        %v1306 = vadd.f32 0.0, %v1305
        %v1307 = vpop.f32.mrb[0].mxu0
        %v1308 = vpop.f32.mrb[0].mxu0
        %v1309 = vadd.f32 0.0, %v1308
        %v1310 = vpop.f32.mrb[0].mxu0
        %1311 = vmatprep.mubr.bf16.mxu0 0
        %1312 = vmatmul.mubr.bf16.gmra.mrb[0].mxu0 %v1036
        %v1313 = vpop.f32.mrb[0].mxu0
        %v1314 = vadd.f32 0.0, %v1313
        %v1315 = vpop.f32.mrb[0].mxu0
        %v1316 = vpop.f32.mrb[0].mxu0
        %v1317 = vadd.f32 0.0, %v1316
        %v1318 = vpop.f32.mrb[0].mxu0
        %1319 = vmatprep.mubr.bf16.mxu0 0
        %1320 = vmatmul.mubr.bf16.gmra.mrb[0].mxu0 %v1037
        %v1321 = vpop.f32.mrb[0].mxu0
        %v1322 = vadd.f32 0.0, %v1321
        %v1323 = vpop.f32.mrb[0].mxu0
        %v1324 = vpop.f32.mrb[0].mxu0
        %v1325 = vadd.f32 0.0, %v1324
        %v1326 = vpop.f32.mrb[0].mxu0
        %1327 = vmatprep.mubr.bf16.mxu0 0
        %1328 = vmatmul.mubr.bf16.gmra.mrb[0].mxu0 %v1038
        %v1329 = vpop.f32.mrb[0].mxu0
        %v1330 = vadd.f32 0.0, %v1329
        %v1331 = vpop.f32.mrb[0].mxu0
        %v1332 = vpop.f32.mrb[0].mxu0
        %v1333 = vadd.f32 0.0, %v1332
        %v1334 = vpop.f32.mrb[0].mxu0
        %1335 = vmatprep.mubr.bf16.mxu0 0
        %1336 = vmatmul.mubr.bf16.gmra.mrb[0].mxu0 %v1039
        %v1337 = vpop.f32.mrb[0].mxu0
        %v1338 = vadd.f32 0.0, %v1337
        %v1339 = vpop.f32.mrb[0].mxu0
        %v1340 = vpop.f32.mrb[0].mxu0
        %v1341 = vadd.f32 0.0, %v1340
        %v1342 = vpop.f32.mrb[0].mxu0
        %1343 = vmatprep.mubr.bf16.mxu0 0
        %1344 = vmatmul.mubr.bf16.gmra.mrb[0].mxu0 %v1040
        %v1345 = vpop.f32.mrb[0].mxu0
        %v1346 = vadd.f32 0.0, %v1345
        %v1347 = vpop.f32.mrb[0].mxu0
        %v1348 = vpop.f32.mrb[0].mxu0
        %v1349 = vadd.f32 0.0, %v1348
        %v1350 = vpop.f32.mrb[0].mxu0
        %1351 = vmatprep.mubr.bf16.mxu0 0
        %1352 = vmatmul.mubr.bf16.gmra.mrb[0].mxu0 %v1041
        %v1353 = vpop.f32.mrb[0].mxu0
        %v1354 = vadd.f32 0.0, %v1353
        %v1355 = vpop.f32.mrb[0].mxu0
        %v1356 = vpop.f32.mrb[0].mxu0
        %v1357 = vadd.f32 0.0, %v1356
        %v1358 = vpop.f32.mrb[0].mxu0
        %1359 = vmatprep.mubr.bf16.mxu0 0
        %1360 = vmatmul.mubr.bf16.gmra.mrb[0].mxu0 %v1042
        %v1361 = vpop.f32.mrb[0].mxu0
        %v1362 = vadd.f32 0.0, %v1361
        %v1363 = vpop.f32.mrb[0].mxu0
        %v1364 = vpop.f32.mrb[0].mxu0
        %v1365 = vadd.f32 0.0, %v1364
        %v1366 = vpop.f32.mrb[0].mxu0
        %1367 = vmatprep.mubr.bf16.mxu0 0
        %1368 = vmatmul.mubr.bf16.gmra.mrb[0].mxu0 %v1043
        %v1369 = vpop.f32.mrb[0].mxu0
        %v1370 = vadd.f32 0.0, %v1369
        %v1371 = vpop.f32.mrb[0].mxu0
        %v1372 = vpop.f32.mrb[0].mxu0
        %v1373 = vadd.f32 0.0, %v1372
        %v1374 = vpop.f32.mrb[0].mxu0
        %1375 = vmatprep.mubr.bf16.mxu0 0
        %1376 = vmatmul.mubr.bf16.gmra.mrb[0].mxu0 %v1044
        %v1377 = vpop.f32.mrb[0].mxu0
        %v1378 = vadd.f32 0.0, %v1377
        %v1379 = vpop.f32.mrb[0].mxu0
        %v1380 = vpop.f32.mrb[0].mxu0
        %v1381 = vadd.f32 0.0, %v1380
        %v1382 = vpop.f32.mrb[0].mxu0
        %1383 = vmatprep.mubr.bf16.mxu0 0
        %1384 = vmatmul.mubr.bf16.gmra.mrb[0].mxu0 %v1045
        %v1385 = vpop.f32.mrb[0].mxu0
        %v1386 = vadd.f32 0.0, %v1385
        %v1387 = vpop.f32.mrb[0].mxu0
        %v1388 = vpop.f32.mrb[0].mxu0
        %v1389 = vadd.f32 0.0, %v1388
        %v1390 = vpop.f32.mrb[0].mxu0
        %1391 = vmatprep.mubr.bf16.mxu0 0
        %1392 = vmatmul.mubr.bf16.gmra.mrb[0].mxu0 %v1046
        %v1393 = vpop.f32.mrb[0].mxu0
        %v1394 = vadd.f32 0.0, %v1393
        %v1395 = vpop.f32.mrb[0].mxu0
        %v1396 = vpop.f32.mrb[0].mxu0
        %v1397 = vadd.f32 0.0, %v1396
        %v1398 = vpop.f32.mrb[0].mxu0
        %1399 = vdwg.mxu0
        %v1400 = vpack.c.bf16 %v1277, %v1274
        %v1401 = vpack.c.bf16 %v1285, %v1282
        %v1402 = vpack.c.bf16 %v1293, %v1290
        %v1403 = vpack.c.bf16 %v1301, %v1298
        %v1404 = vpack.c.bf16 %v1309, %v1306
        %v1405 = vpack.c.bf16 %v1317, %v1314
        %v1406 = vpack.c.bf16 %v1325, %v1322
        %v1407 = vpack.c.bf16 %v1333, %v1330
        %v1408 = vpack.c.bf16 %v1341, %v1338
        %v1409 = vpack.c.bf16 %v1349, %v1346
        %v1410 = vpack.c.bf16 %v1357, %v1354
        %v1411 = vpack.c.bf16 %v1365, %v1362
        %v1412 = vpack.c.bf16 %v1373, %v1370
        %v1413 = vpack.c.bf16 %v1381, %v1378
        %v1414 = vpack.c.bf16 %v1389, %v1386
        %v1415 = vpack.c.bf16 %v1397, %v1394
        %v1432 = vunpack.c.l.b16 %v1400
        %v1433 = vunpack.c.h.b16 %v1400
        %v1434 = vunpack.c.l.b16 %v1401
        %v1435 = vunpack.c.h.b16 %v1401
        %v1436 = vunpack.c.l.b16 %v1402
        %v1437 = vunpack.c.h.b16 %v1402
        %v1438 = vunpack.c.l.b16 %v1403
        %v1439 = vunpack.c.h.b16 %v1403
        %v1440 = vunpack.c.l.b16 %v1404
        %v1441 = vunpack.c.h.b16 %v1404
        %v1442 = vunpack.c.l.b16 %v1405
        %v1443 = vunpack.c.h.b16 %v1405
        %v1444 = vunpack.c.l.b16 %v1406
        %v1445 = vunpack.c.h.b16 %v1406
        %v1446 = vunpack.c.l.b16 %v1407
        %v1447 = vunpack.c.h.b16 %v1407
        %v1448 = vunpack.c.l.b16 %v1408
        %v1449 = vunpack.c.h.b16 %v1408
        %v1450 = vunpack.c.l.b16 %v1409
        %v1451 = vunpack.c.h.b16 %v1409
        %v1452 = vunpack.c.l.b16 %v1410
        %v1453 = vunpack.c.h.b16 %v1410
        %v1454 = vunpack.c.l.b16 %v1411
        %v1455 = vunpack.c.h.b16 %v1411
        %v1456 = vunpack.c.l.b16 %v1412
        %v1457 = vunpack.c.h.b16 %v1412
        %v1458 = vunpack.c.l.b16 %v1413
        %v1459 = vunpack.c.h.b16 %v1413
        %v1460 = vunpack.c.l.b16 %v1414
        %v1461 = vunpack.c.h.b16 %v1414
        %v1462 = vunpack.c.l.b16 %v1415
        %v1463 = vunpack.c.h.b16 %v1415
        %v1464 = vpack.c.b16 %v1432, %v1432
        %v1465 = vpack.c.b16 %v1433, %v1433
        %v1466 = vpack.c.b16 %v1434, %v1434
        %v1467 = vpack.c.b16 %v1435, %v1435
        %v1468 = vpack.c.b16 %v1436, %v1436
        %v1469 = vpack.c.b16 %v1437, %v1437
        %v1470 = vpack.c.b16 %v1438, %v1438
        %v1471 = vpack.c.b16 %v1439, %v1439
        %v1472 = vpack.c.b16 %v1440, %v1440
        %v1473 = vpack.c.b16 %v1441, %v1441
        %v1474 = vpack.c.b16 %v1442, %v1442
        %v1475 = vpack.c.b16 %v1443, %v1443
        %v1476 = vpack.c.b16 %v1444, %v1444
        %v1477 = vpack.c.b16 %v1445, %v1445
        %v1478 = vpack.c.b16 %v1446, %v1446
        %v1479 = vpack.c.b16 %v1447, %v1447
        %v1480 = vpack.c.b16 %v1448, %v1448
        %v1481 = vpack.c.b16 %v1449, %v1449
        %v1482 = vpack.c.b16 %v1450, %v1450
        %v1483 = vpack.c.b16 %v1451, %v1451
        %v1484 = vpack.c.b16 %v1452, %v1452
        %v1485 = vpack.c.b16 %v1453, %v1453
        %v1486 = vpack.c.b16 %v1454, %v1454
        %v1487 = vpack.c.b16 %v1455, %v1455
        %v1488 = vpack.c.b16 %v1456, %v1456
        %v1489 = vpack.c.b16 %v1457, %v1457
        %v1490 = vpack.c.b16 %v1458, %v1458
        %v1491 = vpack.c.b16 %v1459, %v1459
        %v1492 = vpack.c.b16 %v1460, %v1460
        %v1493 = vpack.c.b16 %v1461, %v1461
        %v1494 = vpack.c.b16 %v1462, %v1462
        %v1495 = vpack.c.b16 %v1463, %v1463
        %vm1528 = vcmask 519168
        %1529 = vst.msk [vmem:[%s288] sm:$0xf] %vm1528, %v1464
        %1530 = vst.msk [vmem:[%s288 + $0x4] sm:$0xf] %vm1528, %v1465
        %1531 = vst.msk [vmem:[%s288 + $0x8] sm:$0xf] %vm1528, %v1466
        %1532 = vst.msk [vmem:[%s288 + $0xc] sm:$0xf] %vm1528, %v1467
        %1533 = vst.msk [vmem:[%s288 + $0x10] sm:$0xf] %vm1528, %v1468
        %1534 = vst.msk [vmem:[%s288 + $0x14] sm:$0xf] %vm1528, %v1469
        %1535 = vst.msk [vmem:[%s288 + $0x18] sm:$0xf] %vm1528, %v1470
        %1536 = vst.msk [vmem:[%s288 + $0x1c] sm:$0xf] %vm1528, %v1471
        %1537 = vst.msk [vmem:[%s288 + $0x20] sm:$0xf] %vm1528, %v1472
        %1538 = vst.msk [vmem:[%s288 + $0x24] sm:$0xf] %vm1528, %v1473
        %1539 = vst.msk [vmem:[%s288 + $0x28] sm:$0xf] %vm1528, %v1474
        %1540 = vst.msk [vmem:[%s288 + $0x2c] sm:$0xf] %vm1528, %v1475
        %1541 = vst.msk [vmem:[%s288 + $0x30] sm:$0xf] %vm1528, %v1476
        %1542 = vst.msk [vmem:[%s288 + $0x34] sm:$0xf] %vm1528, %v1477
        %1543 = vst.msk [vmem:[%s288 + $0x38] sm:$0xf] %vm1528, %v1478
        %1544 = vst.msk [vmem:[%s288 + $0x3c] sm:$0xf] %vm1528, %v1479
        %1545 = vst.msk [vmem:[%s288 + $0x40] sm:$0xf] %vm1528, %v1480
        %1546 = vst.msk [vmem:[%s288 + $0x44] sm:$0xf] %vm1528, %v1481
        %1547 = vst.msk [vmem:[%s288 + $0x48] sm:$0xf] %vm1528, %v1482
        %1548 = vst.msk [vmem:[%s288 + $0x4c] sm:$0xf] %vm1528, %v1483
        %1549 = vst.msk [vmem:[%s288 + $0x50] sm:$0xf] %vm1528, %v1484
        %1550 = vst.msk [vmem:[%s288 + $0x54] sm:$0xf] %vm1528, %v1485
        %1551 = vst.msk [vmem:[%s288 + $0x58] sm:$0xf] %vm1528, %v1486
        %1552 = vst.msk [vmem:[%s288 + $0x5c] sm:$0xf] %vm1528, %v1487
        %1553 = vst.msk [vmem:[%s288 + $0x60] sm:$0xf] %vm1528, %v1488
        %1554 = vst.msk [vmem:[%s288 + $0x64] sm:$0xf] %vm1528, %v1489
        %1555 = vst.msk [vmem:[%s288 + $0x68] sm:$0xf] %vm1528, %v1490
        %1556 = vst.msk [vmem:[%s288 + $0x6c] sm:$0xf] %vm1528, %v1491
        %1557 = vst.msk [vmem:[%s288 + $0x70] sm:$0xf] %vm1528, %v1492
        %1558 = vst.msk [vmem:[%s288 + $0x74] sm:$0xf] %vm1528, %v1493
        %1559 = vst.msk [vmem:[%s288 + $0x78] sm:$0xf] %vm1528, %v1494
        %1560 = vst.msk [vmem:[%s288 + $0x7c] sm:$0xf] %vm1528, %v1495
        %s1561 = smul.u32 32, %s24
        %p1562 = scmp.lt.s32.totalorder %s23, 1
        %s1563 = scalar_select %p1562, %s23, 1
        %p1564 = scmp.lt.s32.totalorder %s1561, 63
        %s1565 = scalar_select %p1564, %s1561, 63
        %s1566 = smul.addr %s1563, 64
        %s1567 = sadd.s32 %s1565, %s1566
        %s1568 = smul.addr %s1567, 4
        %s1569 = scalar_lea.vmem %s3, %s1568
        %s1570 = sand.u32 %s149, 1
        %s1571 = scalar_lea.sflag [#allocation3], %s1570
        %s1572 = sand.u32 %s149, 1
        %s1573 = smul.addr %s1572, 128
        %s1574 = scalar_lea.vmem [#allocation2], %s1573
        // Predicated region
        $region33: #{tpu_custom_call.1} parent=31 // pred_check
          %p1575 = pneg %p131
        $region34: #{tpu_custom_call.1} parent=31 // pred_check_branch
          %1577 = sbr.rel (%p1575) target = $region36
        $region35: #{tpu_custom_call.1} parent=31 // pred_region
          %s1578 = smul.u32 32, %s24
        $region36: #{tpu_custom_call.1} parent=31 // pred_fallthru
          _
        // Predicated region
        $region37: #{tpu_custom_call.1} parent=31 // pred_check
          %p1579 = pneg %p159
        $region38: #{tpu_custom_call.1} parent=31 // pred_check_branch
          %1581 = sbr.rel (%p1579) target = $region40
        $region39: #{tpu_custom_call.1} parent=31 // pred_region
          %s1582 = smul.u32 32, %s24
          %s1584 = ssub.s32 2048, 2048
          %1585 = vsyncadd %s1571, %s1584
          %s1586 = smul.addr %s23, 64
          %s1587 = sadd.s32 %s1582, %s1586
          %s1588 = smul.addr %s1587, 64
          %s1589 = scalar_lea.hbm %s4, %s1588
          %s1590 = sshll.u32 %s1574, 4
          %s1591 = int_to_ptr.vmem [resolvable:$true] %s1590
          %1596 = dma.vmem_to_hbm [thread:$0]  %s1591, 2048, %s1589, %s1571, 64, 64, 4
        $region40: #{tpu_custom_call.1} parent=31 // pred_fallthru
          _
      $region32: #{tpu_custom_call.1} parent=5 // pred_fallthru
        _
      %p1597 = scmp.le.s32.totalorder 2, %s14
      // Predicated region
      $region41: #{tpu_custom_call.1} parent=5 // pred_check
        %p1598 = pneg %p1597
      $region42: #{tpu_custom_call.1} parent=5 // pred_check_branch
        %1600 = sbr.rel (%p1598) target = $region44
      $region43: #{tpu_custom_call.1} parent=5 // pred_region
        %s1601 = ssub.s32 %s14, 2
        // Predicated region
        $region45: #{tpu_custom_call.1} parent=43 // pred_check
          %p1602 = pneg %p137
        $region46: #{tpu_custom_call.1} parent=43 // pred_check_branch
          %1604 = sbr.rel (%p1602) target = $region48
        $region47: #{tpu_custom_call.1} parent=43 // pred_region
          %s1605 = smul.u32 32, %s26
          %p1606 = scmp.lt.s32.totalorder %s25, 1
          %s1607 = scalar_select %p1606, %s25, 1
          %p1608 = scmp.lt.s32.totalorder %s1605, 63
          %s1609 = scalar_select %p1608, %s1605, 63
          %s1610 = smul.addr %s1607, 64
          %s1611 = sadd.s32 %s1609, %s1610
          %s1612 = smul.addr %s1611, 4
          %s1613 = scalar_lea.vmem %s3, %s1612
        $region48: #{tpu_custom_call.1} parent=43 // pred_fallthru
          _
        // Predicated region
        $region49: #{tpu_custom_call.1} parent=43 // pred_check
          %p1614 = pneg %p165
        $region50: #{tpu_custom_call.1} parent=43 // pred_check_branch
          %1616 = sbr.rel (%p1614) target = $region52
        $region51: #{tpu_custom_call.1} parent=43 // pred_region
          %s1617 = sand.u32 %s150, 1
          %s1618 = scalar_lea.sflag [#allocation3], %s1617
          %s1619 = sand.u32 %s150, 1
          %s1620 = smul.addr %s1619, 128
          %s1621 = scalar_lea.vmem [#allocation2], %s1620
          %1622 = dma.done %s1618, 2048
        $region52: #{tpu_custom_call.1} parent=43 // pred_fallthru
          _
      $region44: #{tpu_custom_call.1} parent=5 // pred_fallthru
        _
    $region6: #{tpu_custom_call.1} parent=1 // loop_footer
      %s18 = sadd.s32 1, %s14
    $region7: #{tpu_custom_call.1} parent=1 // loop_footer_branch
      %13 = sbr.rel target = $region3
    $region8: #{tpu_custom_call.1} parent=1 // loop_exit
      _
    %1623 = vsyncpa [#allocation3], 1
    %s1624 = scalar_lea.sflag [#allocation3], 1
    %1625 = vsyncpa %s1624, 1

</llo_original>
